<compile_context>
chip_gen: v7x
topology: tpu7x:2x2x1
jax: 0.10.0
libtpu: 0.0.40
codegen_flags: <defaults>
</compile_context>

<pallas_src>
import functools
import math

import jax
import jax.numpy as jnp
from jax.experimental import pallas as pl
from jax.experimental.pallas import tpu as pltpu

EPS = 1e-5  # nn.LayerNorm default

# Kernel-side per-layer parameter order (all with a leading layer axis; one
# layer's slice is streamed per grid step along the layer axis).
_PARAM_ORDER = (
    "ln1_g", "ln1_b",   # (L, 1, E)  f32
    "wqkv", "bqkv",     # (L, E, 3E) bf16, (L, 1, 3E) f32   (scale folded into Q)
    "wo", "bo",         # (L, E, E)  bf16, (L, 1, E)  f32
    "ln2_g", "ln2_b",   # (L, 1, E)  f32
    "w1", "b1",         # (L, E, F)  bf16, (L, 1, F)  f32
    "w2", "b2",         # (L, F, E)  bf16, (L, 1, E)  f32
)


# ---------------------------------------------------------------------------
# shared math helpers (pure jnp: used by kernel and reference)
# ---------------------------------------------------------------------------
def _layernorm(x, g, b):
    mu = jnp.mean(x, axis=-1, keepdims=True)
    var = jnp.mean((x - mu) ** 2, axis=-1, keepdims=True)
    return (x - mu) * jax.lax.rsqrt(var + EPS) * g + b


def _gelu(x):
    # tanh-approx GELU, kept in f32 (v5e VPU has no bf16).
    c = jnp.float32(0.7978845608028654)  # sqrt(2/pi)
    return 0.5 * x * (1.0 + jnp.tanh(c * (x + 0.044715 * x * x * x)))


# ---------------------------------------------------------------------------
# Pallas kernel: one TransformerBlock per grid step along the layer axis,
# one row (batch) tile per grid step along the row axis.
#
# Invariant: the residual stream is carried across the layer axis in
# `x_scratch`, which is only correct because the layer axis is the INNERMOST
# grid axis and is marked "arbitrary" (sequential).  Do not reorder the grid.
# ---------------------------------------------------------------------------
def _block_kernel(num_heads, fc,
                  x_ref,
                  ln1g_ref, ln1b_ref, wqkv_ref, bqkv_ref, wo_ref, bo_ref,
                  ln2g_ref, ln2b_ref, w1_ref, b1_ref, w2_ref, b2_ref,
                  o_ref, x_scratch, ctx_scratch):
    l = pl.program_id(1)
    num_layers = pl.num_programs(1)

    TB, S, E = x_scratch.shape
    H = num_heads
    D = E // H
    M = TB * S
    F = w1_ref.shape[-1]

    @pl.when(l == 0)
    def _():
        x_scratch[...] = x_ref[...].astype(jnp.float32)

    # Residual stream, flattened to (rows, E) for MXU-friendly matmuls.
    xm = x_scratch[...].reshape(M, E)

    # ---- multi-head attention on LN1(x) ----
    h = _layernorm(xm, ln1g_ref[0], ln1b_ref[0])
    # Fused Q/K/V projection: one (M, 3E) matmul, bf16 operands, f32 accum.
    # Cast to bf16 once; the 1/sqrt(E) scale is already folded into Wq/bq.
    qkv = (jnp.dot(h.astype(jnp.bfloat16), wqkv_ref[0],
                   preferred_element_type=jnp.float32)
           + bqkv_ref[0]).astype(jnp.bfloat16)
    qkv = qkv.reshape(TB, S, 3 * E)

    for hd in range(H):
        qh = qkv[:, :, hd * D:(hd + 1) * D]
        kh = qkv[:, :, E + hd * D:E + (hd + 1) * D]
        vh = qkv[:, :, 2 * E + hd * D:2 * E + (hd + 1) * D]
        # Batched over the TB batch tile; contraction on the last dim, so K is
        # consumed without an explicit transpose.
        s = jnp.einsum("bqd,bkd->bqk", qh, kh,
                       preferred_element_type=jnp.float32)
        m = jnp.max(s, axis=-1, keepdims=True)
        e = jnp.exp(s - m)
        p = e * pl.reciprocal(jnp.sum(e, axis=-1, keepdims=True), approx=True)
        ctx = jnp.einsum("bqk,bkd->bqd", p.astype(jnp.bfloat16), vh,
                         preferred_element_type=jnp.float32)
        # Assemble heads into their lane slices, then one full-width W_o matmul
        # (instead of H small K=D matmuls).
        ctx_scratch[:, hd * D:(hd + 1) * D] = (
            ctx.reshape(M, D).astype(jnp.bfloat16))

    attn_out = jnp.dot(ctx_scratch[...], wo_ref[0],
                       preferred_element_type=jnp.float32)
    xm = xm + attn_out + bo_ref[0]

    # ---- MLP on LN2(x), hidden dimension tiled in chunks of `fc` lanes ----
    h2 = _layernorm(xm, ln2g_ref[0], ln2b_ref[0]).astype(jnp.bfloat16)
    mlp = jnp.zeros((M, E), jnp.float32)
    for c in range(F // fc):
        w1c = w1_ref[0, :, c * fc:(c + 1) * fc]          # (E, fc)  bf16
        b1c = b1_ref[0, :, c * fc:(c + 1) * fc]          # (1, fc)  f32
        w2c = w2_ref[0, c * fc:(c + 1) * fc, :]          # (fc, E)  bf16
        m1 = jnp.dot(h2, w1c, preferred_element_type=jnp.float32) + b1c
        m1 = _gelu(m1)                                   # f32 elementwise
        mlp = mlp + jnp.dot(m1.astype(jnp.bfloat16), w2c,
                            preferred_element_type=jnp.float32)
    xm = xm + mlp + b2_ref[0]

    x_scratch[...] = xm.reshape(TB, S, E)

    @pl.when(l == num_layers - 1)
    def _():
        o_ref[...] = x_scratch[...].astype(o_ref.dtype)


# ---------------------------------------------------------------------------
# wrapper helpers
# ---------------------------------------------------------------------------
def _layer_block_spec(arr):
    nd = arr.ndim
    return pl.BlockSpec((1,) + tuple(arr.shape[1:]),
                        lambda r, l, _nd=nd: (l,) + (0,) * (_nd - 1))


def _pack_params(params, num_heads):
    """Pack logical f32 module params into the streamed kernel layout."""
    L, E, _ = params["wq"].shape
    scale = jnp.float32(1.0 / math.sqrt(E))  # module scales by 1/sqrt(embed)
    f32, bf16 = jnp.float32, jnp.bfloat16
    vec = lambda a: a.reshape(L, 1, -1).astype(f32)
    wq = params["wq"] * scale   # fold attention scale into Q projection
    bq = params["bq"] * scale
    return {
        "ln1_g": vec(params["ln1_g"]), "ln1_b": vec(params["ln1_b"]),
        "wqkv": jnp.concatenate(
            [wq, params["wk"], params["wv"]], axis=-1).astype(bf16),
        "bqkv": vec(jnp.concatenate(
            [bq, params["bk"], params["bv"]], axis=-1)),
        "wo": params["wo"].astype(bf16),
        "bo": vec(params["bo"]),
        "ln2_g": vec(params["ln2_g"]), "ln2_b": vec(params["ln2_b"]),
        "w1": params["w1"].astype(bf16), "b1": vec(params["b1"]),
        "w2": params["w2"].astype(bf16), "b2": vec(params["b2"]),
    }


def _physical_vmem_bytes():
    try:
        return int(pltpu.get_tpu_info().vmem_capacity_bytes)
    except Exception:
        return 64 * 1024 * 1024  # conservative (v7x-sized) fallback


def _pick_fc(F, cap=1024):
    """MLP hidden-dim chunk: largest divisor of F <= cap (128-multiple pref)."""
    if F <= cap:
        return F
    for cand in range(cap - (cap % 128), 127, -128):
        if F % cand == 0:
            return cand
    for cand in range(cap, 0, -1):
        if F % cand == 0:
            return cand
    return F


def _vmem_estimate(tb, S, E, F, fc):
    """Rough per-grid-step VMEM footprint (bytes) used to cap the row tile."""
    M = tb * S
    w = 2 * 2 * (3 * E * E + E * E + E * F + F * E)        # bf16 weights, 2-buf
    v = 2 * 4 * (9 * E + F)                                 # f32 vectors, 2-buf
    io = 2 * 2 * 4 * tb * S * E                             # x in + out, 2-buf
    scr = 4 * tb * S * E + 2 * M * E                        # residual + ctx
    tmp = (2 * M * 3 * E                                    # bf16 qkv
           + 2 * 4 * tb * S * S                             # per-head scores
           + 2 * 4 * M * fc                                 # MLP chunk
           + 5 * 4 * M * E)                                 # working (M,E) f32
    return w + v + io + scr + tmp


def transformer_blocks_forward(x, params, num_heads, *,
                               row_target=None, vmem_limit_bytes=None):
    """Apply the stack of TransformerBlocks to x: (B, S, E)."""
    B, S, E = x.shape
    L = params["wq"].shape[0]
    F = params["w1"].shape[-1]
    packed = _pack_params(params, num_heads)

    phys_vmem = _physical_vmem_bytes()
    if vmem_limit_bytes is None:
        # ~56 MiB on v7x (64 MiB physical), ~112 MiB on v5e/v6e (128 MiB).
        vmem_limit_bytes = min(int(phys_vmem * 7 // 8), 112 * 1024 * 1024)
    if row_target is None:
        # v7x (64 MiB VMEM): ~512-768 rows; v5e/v6e (128 MiB): ~1024-2048.
        row_target = 640 if phys_vmem <= 64 * 1024 * 1024 else 1536

    fc = _pick_fc(F)

    # Row (batch) tile: flatten (TB, S) into the matmul row dimension, aiming
    # for ~row_target rows to amortize per-layer weight DMA, capped by the
    # VMEM budget.
    TB = 1
    for cand in range(1, B + 1):
        if B % cand:
            continue
        if cand * S > max(row_target, S):
            continue
        if _vmem_estimate(cand, S, E, F, fc) > vmem_limit_bytes:
            continue
        TB = cand
    # Megacore: keep >= 2 row tiles when we can do so without dropping below
    # half the chosen rows, so the "parallel" axis can span both TensorCores.
    if B // TB < 2:
        for cand in range(TB - 1, 0, -1):
            if B % cand == 0 and B // cand >= 2 and 2 * cand >= TB:
                TB = cand
                break

    # Grid order matters: the layer axis MUST be innermost and "arbitrary"
    # because the residual stream is carried across it in a VMEM scratch.
    grid = (B // TB, L)

    in_specs = [pl.BlockSpec((TB, S, E), lambda r, l: (r, 0, 0))]
    inputs = [x]
    for name in _PARAM_ORDER:
        arr = packed[name]
        in_specs.append(_layer_block_spec(arr))
        inputs.append(arr)

    kernel = functools.partial(_block_kernel, num_heads, fc)
    return pl.pallas_call(
        kernel,
        out_shape=jax.ShapeDtypeStruct((B, S, E), x.dtype),
        grid=grid,
        in_specs=in_specs,
        out_specs=pl.BlockSpec((TB, S, E), lambda r, l: (r, 0, 0)),
        scratch_shapes=[
            pltpu.VMEM((TB, S, E), jnp.float32),      # residual stream
            pltpu.VMEM((TB * S, E), jnp.bfloat16),    # assembled head contexts
        ],
        compiler_params=pltpu.CompilerParams(
            dimension_semantics=("parallel", "arbitrary"),
            vmem_limit_bytes=vmem_limit_bytes,
        ),
    )(*inputs)


# ---------------------------------------------------------------------------
# pure-JAX f32 reference (mirrors the PyTorch module math)
# ---------------------------------------------------------------------------
def reference_forward(x, params, num_heads):
    L, E, _ = params["wq"].shape
    H = num_heads
    D = E // H
    scale = 1.0 / math.sqrt(E)
    h = x.astype(jnp.float32)
    for l in range(L):
        y = _layernorm(h, params["ln1_g"][l], params["ln1_b"][l])
        q = y @ params["wq"][l] + params["bq"][l]
        k = y @ params["wk"][l] + params["bk"][l]
        v = y @ params["wv"][l] + params["bv"][l]
        heads = []
        for hd in range(H):
            sl = slice(hd * D, (hd + 1) * D)
            e = jnp.einsum("bqd,bkd->bqk", q[..., sl], k[..., sl]) * scale
            a = jax.nn.softmax(e, axis=-1)
            heads.append(jnp.einsum("bqk,bkd->bqd", a, v[..., sl]))
        ctx = jnp.concatenate(heads, axis=-1)
        h = h + ctx @ params["wo"][l] + params["bo"][l]
        y2 = _layernorm(h, params["ln2_g"][l], params["ln2_b"][l])
        m = _gelu(y2 @ params["w1"][l] + params["b1"][l])
        h = h + m @ params["w2"][l] + params["b2"][l]
    return h


# ---------------------------------------------------------------------------
# deterministic synthetic parameters (logical f32 layout, mirroring nn.Linear
# with weights stored as (in_features, out_features))
# ---------------------------------------------------------------------------
def init_params(key, num_layers, embed_size, forward_expansion):
    hidden = forward_expansion * embed_size
    L, E = num_layers, embed_size
    keys = jax.random.split(key, 10)

    def w(k, shape, scale=0.05):
        return (scale * jax.random.normal(k, shape)).astype(jnp.float32)

    return {
        "ln1_g": jnp.ones((L, E), jnp.float32),
        "ln1_b": jnp.zeros((L, E), jnp.float32),
        "wq": w(keys[0], (L, E, E)), "bq": w(keys[1], (L, E)),
        "wk": w(keys[2], (L, E, E)), "bk": w(keys[3], (L, E)),
        "wv": w(keys[4], (L, E, E)), "bv": w(keys[5], (L, E)),
        "wo": w(keys[6], (L, E, E)), "bo": w(keys[7], (L, E)),
        "ln2_g": jnp.ones((L, E), jnp.float32),
        "ln2_b": jnp.zeros((L, E), jnp.float32),
        "w1": w(keys[8], (L, E, hidden)),
        "b1": jnp.zeros((L, hidden), jnp.float32),
        "w2": w(keys[9], (L, hidden, E)),
        "b2": jnp.zeros((L, E), jnp.float32),
    }


if __name__ == "__main__":
    # TransformerBlock config: embed=32, 4 heads, forward_expansion=4.
    # A stack of 2 blocks is applied (exercises the layer-streaming grid axis;
    # each grid step along that axis is exactly one TransformerBlock.forward).
    B, S, E = 2, 8, 32
    num_heads, forward_expansion, num_layers = 4, 4, 2

    key = jax.random.PRNGKey(0)
    kx, kp = jax.random.split(key)
    x = jax.random.normal(kx, (B, S, E), dtype=jnp.float32)
    params = init_params(kp, num_layers, E, forward_expansion)

    out = transformer_blocks_forward(x, params, num_heads)
    out = jax.block_until_ready(out)

    ref = reference_forward(x, params, num_heads)
    assert out.shape == (B, S, E) and out.dtype == x.dtype
    max_err = float(jnp.max(jnp.abs(out - ref)))
    assert jnp.allclose(out, ref, atol=3e-2, rtol=3e-2), f"max err {max_err}"
    print("KERNEL_OK")
</pallas_src>

<mosaic_0001>
module attributes {stable_mosaic.version = 11 : i64} {
  func.func @_block_kernel(%arg0: i32, %arg1: i32, %arg2: memref<1x8x32xf32, #tpu.memory_space<vmem>>, %arg3: memref<1x1x32xf32, #tpu.memory_space<vmem>>, %arg4: memref<1x1x32xf32, #tpu.memory_space<vmem>>, %arg5: memref<1x32x96xbf16, #tpu.memory_space<vmem>>, %arg6: memref<1x1x96xf32, #tpu.memory_space<vmem>>, %arg7: memref<1x32x32xbf16, #tpu.memory_space<vmem>>, %arg8: memref<1x1x32xf32, #tpu.memory_space<vmem>>, %arg9: memref<1x1x32xf32, #tpu.memory_space<vmem>>, %arg10: memref<1x1x32xf32, #tpu.memory_space<vmem>>, %arg11: memref<1x32x128xbf16, #tpu.memory_space<vmem>>, %arg12: memref<1x1x128xf32, #tpu.memory_space<vmem>>, %arg13: memref<1x128x32xbf16, #tpu.memory_space<vmem>>, %arg14: memref<1x1x32xf32, #tpu.memory_space<vmem>>, %arg15: memref<1x8x32xf32, #tpu.memory_space<vmem>>, %arg16: memref<1x8x32xf32, #tpu.memory_space<vmem>>, %arg17: memref<8x32xbf16, #tpu.memory_space<vmem>>) attributes {dimension_semantics = [#tpu.dimension_semantics<parallel>, #tpu.dimension_semantics<arbitrary>], iteration_bounds = array<i64: 2, 2>, scalar_prefetch = 0 : i64, scratch_operands = 2 : i64, tpu.core_type = #tpu.core_type<tc>, window_params = [{transform_indices = @transform_0, window_bounds = array<i64: 1, 8, 32>}, {transform_indices = @transform_1, window_bounds = array<i64: 1, 1, 32>}, {transform_indices = @transform_2, window_bounds = array<i64: 1, 1, 32>}, {transform_indices = @transform_3, window_bounds = array<i64: 1, 32, 96>}, {transform_indices = @transform_4, window_bounds = array<i64: 1, 1, 96>}, {transform_indices = @transform_5, window_bounds = array<i64: 1, 32, 32>}, {transform_indices = @transform_6, window_bounds = array<i64: 1, 1, 32>}, {transform_indices = @transform_7, window_bounds = array<i64: 1, 1, 32>}, {transform_indices = @transform_8, window_bounds = array<i64: 1, 1, 32>}, {transform_indices = @transform_9, window_bounds = array<i64: 1, 32, 128>}, {transform_indices = @transform_10, window_bounds = array<i64: 1, 1, 128>}, {transform_indices = @transform_11, window_bounds = array<i64: 1, 128, 32>}, {transform_indices = @transform_12, window_bounds = array<i64: 1, 1, 32>}, {transform_indices = @transform_13, window_bounds = array<i64: 1, 8, 32>}]} {
    %c0_i32 = arith.constant 0 : i32
    %0 = arith.cmpi eq, %arg1, %c0_i32 : i32
    %1 = arith.extui %0 : i1 to i32
    %c0_i32_0 = arith.constant 0 : i32
    %2 = arith.cmpi ne, %1, %c0_i32_0 : i32
    scf.if %2 {
      %c0_84 = arith.constant 0 : index
      %c0_85 = arith.constant 0 : index
      %c0_86 = arith.constant 0 : index
      %189 = vector.load %arg2[%c0_84, %c0_85, %c0_86] : memref<1x8x32xf32, #tpu.memory_space<vmem>>, vector<1x8x32xf32>
      %c0_87 = arith.constant 0 : index
      %c0_88 = arith.constant 0 : index
      %c0_89 = arith.constant 0 : index
      %190 = vector.load %arg16[%c0_87, %c0_88, %c0_89] : memref<1x8x32xf32, #tpu.memory_space<vmem>>, vector<1x8x32xf32>
      tpu.vector_store %arg16[%c0_87, %c0_88, %c0_89], %189 {strides = array<i32>} : memref<1x8x32xf32, #tpu.memory_space<vmem>>, vector<1x8x32xf32>,
    } else {
    }
    %c0 = arith.constant 0 : index
    %c0_1 = arith.constant 0 : index
    %c0_2 = arith.constant 0 : index
    %3 = vector.load %arg16[%c0, %c0_1, %c0_2] : memref<1x8x32xf32, #tpu.memory_space<vmem>>, vector<1x8x32xf32>
    %4 = vector.shape_cast %3 : vector<1x8x32xf32> to vector<8x32xf32>
    %c0_3 = arith.constant 0 : index
    %c0_4 = arith.constant 0 : index
    %c0_5 = arith.constant 0 : index
    %5 = vector.load %arg3[%c0_3, %c0_4, %c0_5] : memref<1x1x32xf32, #tpu.memory_space<vmem>>, vector<1x1x32xf32>
    %6 = vector.shape_cast %5 : vector<1x1x32xf32> to vector<1x32xf32>
    %c0_6 = arith.constant 0 : index
    %c0_7 = arith.constant 0 : index
    %c0_8 = arith.constant 0 : index
    %7 = vector.load %arg4[%c0_6, %c0_7, %c0_8] : memref<1x1x32xf32, #tpu.memory_space<vmem>>, vector<1x1x32xf32>
    %8 = vector.shape_cast %7 : vector<1x1x32xf32> to vector<1x32xf32>
    %cst = arith.constant dense<0.000000e+00> : vector<8xf32>
    %9 = vector.multi_reduction <add>, %4, %cst [1] : vector<8x32xf32> to vector<8xf32>
    %10 = vector.shape_cast %9 : vector<8xf32> to vector<8x1xf32>
    %cst_9 = arith.constant 3.200000e+01 : f32
    %11 = vector.broadcast %cst_9 : f32 to vector<8x1xf32>
    %12 = arith.divf %10, %11 : vector<8x1xf32>
    %13 = vector.broadcast %12 : vector<8x1xf32> to vector<8x32xf32>
    %14 = arith.subf %4, %13 : vector<8x32xf32>
    %15 = arith.mulf %14, %14 : vector<8x32xf32>
    %cst_10 = arith.constant dense<0.000000e+00> : vector<8xf32>
    %16 = vector.multi_reduction <add>, %15, %cst_10 [1] : vector<8x32xf32> to vector<8xf32>
    %17 = vector.shape_cast %16 : vector<8xf32> to vector<8x1xf32>
    %cst_11 = arith.constant 3.200000e+01 : f32
    %18 = vector.broadcast %cst_11 : f32 to vector<8x1xf32>
    %19 = arith.divf %17, %18 : vector<8x1xf32>
    %20 = vector.broadcast %12 : vector<8x1xf32> to vector<8x32xf32>
    %21 = arith.subf %4, %20 : vector<8x32xf32>
    %cst_12 = arith.constant 9.99999974E-6 : f32
    %22 = vector.broadcast %cst_12 : f32 to vector<8x1xf32>
    %23 = arith.addf %19, %22 : vector<8x1xf32>
    %24 = math.rsqrt %23 : vector<8x1xf32>
    %25 = vector.broadcast %24 : vector<8x1xf32> to vector<8x32xf32>
    %26 = arith.mulf %21, %25 : vector<8x32xf32>
    %27 = vector.broadcast %6 : vector<1x32xf32> to vector<8x32xf32>
    %28 = arith.mulf %26, %27 : vector<8x32xf32>
    %29 = vector.broadcast %8 : vector<1x32xf32> to vector<8x32xf32>
    %30 = arith.addf %28, %29 : vector<8x32xf32>
    %31 = arith.truncf %30 : vector<8x32xf32> to vector<8x32xbf16>
    %c0_13 = arith.constant 0 : index
    %c0_14 = arith.constant 0 : index
    %c0_15 = arith.constant 0 : index
    %32 = vector.load %arg5[%c0_13, %c0_14, %c0_15] : memref<1x32x96xbf16, #tpu.memory_space<vmem>>, vector<1x32x96xbf16>
    %33 = vector.shape_cast %32 : vector<1x32x96xbf16> to vector<32x96xbf16>
    %cst_16 = arith.constant dense<0.000000e+00> : vector<8x96xf32>
    %34 = tpu.matmul %31, %33, %cst_16 {dimension_numbers = #tpu.dot_dimension_numbers<[1], [0], [0], [1], [0, 0, 1, 1], [], []>} : vector<8x32xbf16>, vector<32x96xbf16>, vector<8x96xf32> -> vector<8x96xf32>
    %c0_17 = arith.constant 0 : index
    %c0_18 = arith.constant 0 : index
    %c0_19 = arith.constant 0 : index
    %35 = vector.load %arg6[%c0_17, %c0_18, %c0_19] : memref<1x1x96xf32, #tpu.memory_space<vmem>>, vector<1x1x96xf32>
    %36 = vector.shape_cast %35 : vector<1x1x96xf32> to vector<1x96xf32>
    %37 = vector.broadcast %36 : vector<1x96xf32> to vector<8x96xf32>
    %38 = arith.addf %34, %37 : vector<8x96xf32>
    %39 = arith.truncf %38 : vector<8x96xf32> to vector<8x96xbf16>
    %40 = vector.shape_cast %39 : vector<8x96xbf16> to vector<1x8x96xbf16>
    %41 = vector.extract_strided_slice %40 {offsets = [0, 0, 0], sizes = [1, 8, 8], strides = [1, 1, 1]} : vector<1x8x96xbf16> to vector<1x8x8xbf16>
    %42 = vector.extract_strided_slice %40 {offsets = [0, 0, 32], sizes = [1, 8, 8], strides = [1, 1, 1]} : vector<1x8x96xbf16> to vector<1x8x8xbf16>
    %43 = vector.extract_strided_slice %40 {offsets = [0, 0, 64], sizes = [1, 8, 8], strides = [1, 1, 1]} : vector<1x8x96xbf16> to vector<1x8x8xbf16>
    "tpu.trace_start"() <{level = 10 : i32, message = "bqd,bkd->bqk"}> : () -> ()
    %cst_20 = arith.constant dense<0.000000e+00> : vector<1x8x8xf32>
    %44 = tpu.matmul %41, %42, %cst_20 {dimension_numbers = #tpu.dot_dimension_numbers<[2], [2], [1], [1], [0, 0, 0, 1, 1, 1], [0], [0]>} : vector<1x8x8xbf16>, vector<1x8x8xbf16>, vector<1x8x8xf32> -> vector<1x8x8xf32>
    "tpu.trace_stop"() : () -> ()
    %cst_21 = arith.constant dense<0xFF800000> : vector<1x8xf32>
    %45 = vector.multi_reduction <maximumf>, %44, %cst_21 [2] : vector<1x8x8xf32> to vector<1x8xf32>
    %46 = vector.shape_cast %45 : vector<1x8xf32> to vector<1x8x1xf32>
    %47 = vector.broadcast %46 : vector<1x8x1xf32> to vector<1x8x8xf32>
    %48 = arith.subf %44, %47 : vector<1x8x8xf32>
    %49 = math.exp %48 : vector<1x8x8xf32>
    %cst_22 = arith.constant dense<0.000000e+00> : vector<1x8xf32>
    %50 = vector.multi_reduction <add>, %49, %cst_22 [2] : vector<1x8x8xf32> to vector<1x8xf32>
    %51 = vector.shape_cast %50 : vector<1x8xf32> to vector<1x8x1xf32>
    %52 = tpu.reciprocal %51 {approx = true} : vector<1x8x1xf32> -> vector<1x8x1xf32>
    %53 = vector.broadcast %52 : vector<1x8x1xf32> to vector<1x8x8xf32>
    %54 = arith.mulf %49, %53 : vector<1x8x8xf32>
    %55 = arith.truncf %54 : vector<1x8x8xf32> to vector<1x8x8xbf16>
    "tpu.trace_start"() <{level = 10 : i32, message = "bqk,bkd->bqd"}> : () -> ()
    %cst_23 = arith.constant dense<0.000000e+00> : vector<1x8x8xf32>
    %56 = tpu.matmul %55, %43, %cst_23 {dimension_numbers = #tpu.dot_dimension_numbers<[2], [1], [1], [2], [0, 0, 0, 1, 1, 2], [0], [0]>} : vector<1x8x8xbf16>, vector<1x8x8xbf16>, vector<1x8x8xf32> -> vector<1x8x8xf32>
    "tpu.trace_stop"() : () -> ()
    %57 = vector.shape_cast %56 : vector<1x8x8xf32> to vector<8x8xf32>
    %58 = arith.truncf %57 : vector<8x8xf32> to vector<8x8xbf16>
    %c0_24 = arith.constant 0 : index
    %c0_25 = arith.constant 0 : index
    %59 = vector.load %arg17[%c0_24, %c0_25] : memref<8x32xbf16, #tpu.memory_space<vmem>>, vector<8x8xbf16>
    tpu.vector_store %arg17[%c0_24, %c0_25], %58 {strides = array<i32>} : memref<8x32xbf16, #tpu.memory_space<vmem>>, vector<8x8xbf16>,
    %60 = vector.extract_strided_slice %40 {offsets = [0, 0, 8], sizes = [1, 8, 8], strides = [1, 1, 1]} : vector<1x8x96xbf16> to vector<1x8x8xbf16>
    %61 = vector.extract_strided_slice %40 {offsets = [0, 0, 40], sizes = [1, 8, 8], strides = [1, 1, 1]} : vector<1x8x96xbf16> to vector<1x8x8xbf16>
    %62 = vector.extract_strided_slice %40 {offsets = [0, 0, 72], sizes = [1, 8, 8], strides = [1, 1, 1]} : vector<1x8x96xbf16> to vector<1x8x8xbf16>
    "tpu.trace_start"() <{level = 10 : i32, message = "bqd,bkd->bqk"}> : () -> ()
    %cst_26 = arith.constant dense<0.000000e+00> : vector<1x8x8xf32>
    %63 = tpu.matmul %60, %61, %cst_26 {dimension_numbers = #tpu.dot_dimension_numbers<[2], [2], [1], [1], [0, 0, 0, 1, 1, 1], [0], [0]>} : vector<1x8x8xbf16>, vector<1x8x8xbf16>, vector<1x8x8xf32> -> vector<1x8x8xf32>
    "tpu.trace_stop"() : () -> ()
    %cst_27 = arith.constant dense<0xFF800000> : vector<1x8xf32>
    %64 = vector.multi_reduction <maximumf>, %63, %cst_27 [2] : vector<1x8x8xf32> to vector<1x8xf32>
    %65 = vector.shape_cast %64 : vector<1x8xf32> to vector<1x8x1xf32>
    %66 = vector.broadcast %65 : vector<1x8x1xf32> to vector<1x8x8xf32>
    %67 = arith.subf %63, %66 : vector<1x8x8xf32>
    %68 = math.exp %67 : vector<1x8x8xf32>
    %cst_28 = arith.constant dense<0.000000e+00> : vector<1x8xf32>
    %69 = vector.multi_reduction <add>, %68, %cst_28 [2] : vector<1x8x8xf32> to vector<1x8xf32>
    %70 = vector.shape_cast %69 : vector<1x8xf32> to vector<1x8x1xf32>
    %71 = tpu.reciprocal %70 {approx = true} : vector<1x8x1xf32> -> vector<1x8x1xf32>
    %72 = vector.broadcast %71 : vector<1x8x1xf32> to vector<1x8x8xf32>
    %73 = arith.mulf %68, %72 : vector<1x8x8xf32>
    %74 = arith.truncf %73 : vector<1x8x8xf32> to vector<1x8x8xbf16>
    "tpu.trace_start"() <{level = 10 : i32, message = "bqk,bkd->bqd"}> : () -> ()
    %cst_29 = arith.constant dense<0.000000e+00> : vector<1x8x8xf32>
    %75 = tpu.matmul %74, %62, %cst_29 {dimension_numbers = #tpu.dot_dimension_numbers<[2], [1], [1], [2], [0, 0, 0, 1, 1, 2], [0], [0]>} : vector<1x8x8xbf16>, vector<1x8x8xbf16>, vector<1x8x8xf32> -> vector<1x8x8xf32>
    "tpu.trace_stop"() : () -> ()
    %76 = vector.shape_cast %75 : vector<1x8x8xf32> to vector<8x8xf32>
    %77 = arith.truncf %76 : vector<8x8xf32> to vector<8x8xbf16>
    %c0_30 = arith.constant 0 : index
    %c8 = arith.constant 8 : index
    %78 = vector.load %arg17[%c0_30, %c8] : memref<8x32xbf16, #tpu.memory_space<vmem>>, vector<8x8xbf16>
    tpu.vector_store %arg17[%c0_30, %c8], %77 {strides = array<i32>} : memref<8x32xbf16, #tpu.memory_space<vmem>>, vector<8x8xbf16>,
    %79 = vector.extract_strided_slice %40 {offsets = [0, 0, 16], sizes = [1, 8, 8], strides = [1, 1, 1]} : vector<1x8x96xbf16> to vector<1x8x8xbf16>
    %80 = vector.extract_strided_slice %40 {offsets = [0, 0, 48], sizes = [1, 8, 8], strides = [1, 1, 1]} : vector<1x8x96xbf16> to vector<1x8x8xbf16>
    %81 = vector.extract_strided_slice %40 {offsets = [0, 0, 80], sizes = [1, 8, 8], strides = [1, 1, 1]} : vector<1x8x96xbf16> to vector<1x8x8xbf16>
    "tpu.trace_start"() <{level = 10 : i32, message = "bqd,bkd->bqk"}> : () -> ()
    %cst_31 = arith.constant dense<0.000000e+00> : vector<1x8x8xf32>
    %82 = tpu.matmul %79, %80, %cst_31 {dimension_numbers = #tpu.dot_dimension_numbers<[2], [2], [1], [1], [0, 0, 0, 1, 1, 1], [0], [0]>} : vector<1x8x8xbf16>, vector<1x8x8xbf16>, vector<1x8x8xf32> -> vector<1x8x8xf32>
    "tpu.trace_stop"() : () -> ()
    %cst_32 = arith.constant dense<0xFF800000> : vector<1x8xf32>
    %83 = vector.multi_reduction <maximumf>, %82, %cst_32 [2] : vector<1x8x8xf32> to vector<1x8xf32>
    %84 = vector.shape_cast %83 : vector<1x8xf32> to vector<1x8x1xf32>
    %85 = vector.broadcast %84 : vector<1x8x1xf32> to vector<1x8x8xf32>
    %86 = arith.subf %82, %85 : vector<1x8x8xf32>
    %87 = math.exp %86 : vector<1x8x8xf32>
    %cst_33 = arith.constant dense<0.000000e+00> : vector<1x8xf32>
    %88 = vector.multi_reduction <add>, %87, %cst_33 [2] : vector<1x8x8xf32> to vector<1x8xf32>
    %89 = vector.shape_cast %88 : vector<1x8xf32> to vector<1x8x1xf32>
    %90 = tpu.reciprocal %89 {approx = true} : vector<1x8x1xf32> -> vector<1x8x1xf32>
    %91 = vector.broadcast %90 : vector<1x8x1xf32> to vector<1x8x8xf32>
    %92 = arith.mulf %87, %91 : vector<1x8x8xf32>
    %93 = arith.truncf %92 : vector<1x8x8xf32> to vector<1x8x8xbf16>
    "tpu.trace_start"() <{level = 10 : i32, message = "bqk,bkd->bqd"}> : () -> ()
    %cst_34 = arith.constant dense<0.000000e+00> : vector<1x8x8xf32>
    %94 = tpu.matmul %93, %81, %cst_34 {dimension_numbers = #tpu.dot_dimension_numbers<[2], [1], [1], [2], [0, 0, 0, 1, 1, 2], [0], [0]>} : vector<1x8x8xbf16>, vector<1x8x8xbf16>, vector<1x8x8xf32> -> vector<1x8x8xf32>
    "tpu.trace_stop"() : () -> ()
    %95 = vector.shape_cast %94 : vector<1x8x8xf32> to vector<8x8xf32>
    %96 = arith.truncf %95 : vector<8x8xf32> to vector<8x8xbf16>
    %c0_35 = arith.constant 0 : index
    %c16 = arith.constant 16 : index
    %97 = vector.load %arg17[%c0_35, %c16] : memref<8x32xbf16, #tpu.memory_space<vmem>>, vector<8x8xbf16>
    tpu.vector_store %arg17[%c0_35, %c16], %96 {strides = array<i32>} : memref<8x32xbf16, #tpu.memory_space<vmem>>, vector<8x8xbf16>,
    %98 = vector.extract_strided_slice %40 {offsets = [0, 0, 24], sizes = [1, 8, 8], strides = [1, 1, 1]} : vector<1x8x96xbf16> to vector<1x8x8xbf16>
    %99 = vector.extract_strided_slice %40 {offsets = [0, 0, 56], sizes = [1, 8, 8], strides = [1, 1, 1]} : vector<1x8x96xbf16> to vector<1x8x8xbf16>
    %100 = vector.extract_strided_slice %40 {offsets = [0, 0, 88], sizes = [1, 8, 8], strides = [1, 1, 1]} : vector<1x8x96xbf16> to vector<1x8x8xbf16>
    "tpu.trace_start"() <{level = 10 : i32, message = "bqd,bkd->bqk"}> : () -> ()
    %cst_36 = arith.constant dense<0.000000e+00> : vector<1x8x8xf32>
    %101 = tpu.matmul %98, %99, %cst_36 {dimension_numbers = #tpu.dot_dimension_numbers<[2], [2], [1], [1], [0, 0, 0, 1, 1, 1], [0], [0]>} : vector<1x8x8xbf16>, vector<1x8x8xbf16>, vector<1x8x8xf32> -> vector<1x8x8xf32>
    "tpu.trace_stop"() : () -> ()
    %cst_37 = arith.constant dense<0xFF800000> : vector<1x8xf32>
    %102 = vector.multi_reduction <maximumf>, %101, %cst_37 [2] : vector<1x8x8xf32> to vector<1x8xf32>
    %103 = vector.shape_cast %102 : vector<1x8xf32> to vector<1x8x1xf32>
    %104 = vector.broadcast %103 : vector<1x8x1xf32> to vector<1x8x8xf32>
    %105 = arith.subf %101, %104 : vector<1x8x8xf32>
    %106 = math.exp %105 : vector<1x8x8xf32>
    %cst_38 = arith.constant dense<0.000000e+00> : vector<1x8xf32>
    %107 = vector.multi_reduction <add>, %106, %cst_38 [2] : vector<1x8x8xf32> to vector<1x8xf32>
    %108 = vector.shape_cast %107 : vector<1x8xf32> to vector<1x8x1xf32>
    %109 = tpu.reciprocal %108 {approx = true} : vector<1x8x1xf32> -> vector<1x8x1xf32>
    %110 = vector.broadcast %109 : vector<1x8x1xf32> to vector<1x8x8xf32>
    %111 = arith.mulf %106, %110 : vector<1x8x8xf32>
    %112 = arith.truncf %111 : vector<1x8x8xf32> to vector<1x8x8xbf16>
    "tpu.trace_start"() <{level = 10 : i32, message = "bqk,bkd->bqd"}> : () -> ()
    %cst_39 = arith.constant dense<0.000000e+00> : vector<1x8x8xf32>
    %113 = tpu.matmul %112, %100, %cst_39 {dimension_numbers = #tpu.dot_dimension_numbers<[2], [1], [1], [2], [0, 0, 0, 1, 1, 2], [0], [0]>} : vector<1x8x8xbf16>, vector<1x8x8xbf16>, vector<1x8x8xf32> -> vector<1x8x8xf32>
    "tpu.trace_stop"() : () -> ()
    %114 = vector.shape_cast %113 : vector<1x8x8xf32> to vector<8x8xf32>
    %115 = arith.truncf %114 : vector<8x8xf32> to vector<8x8xbf16>
    %c0_40 = arith.constant 0 : index
    %c24 = arith.constant 24 : index
    %116 = vector.load %arg17[%c0_40, %c24] : memref<8x32xbf16, #tpu.memory_space<vmem>>, vector<8x8xbf16>
    tpu.vector_store %arg17[%c0_40, %c24], %115 {strides = array<i32>} : memref<8x32xbf16, #tpu.memory_space<vmem>>, vector<8x8xbf16>,
    %c0_41 = arith.constant 0 : index
    %c0_42 = arith.constant 0 : index
    %117 = vector.load %arg17[%c0_41, %c0_42] : memref<8x32xbf16, #tpu.memory_space<vmem>>, vector<8x32xbf16>
    %c0_43 = arith.constant 0 : index
    %c0_44 = arith.constant 0 : index
    %c0_45 = arith.constant 0 : index
    %118 = vector.load %arg7[%c0_43, %c0_44, %c0_45] : memref<1x32x32xbf16, #tpu.memory_space<vmem>>, vector<1x32x32xbf16>
    %119 = vector.shape_cast %118 : vector<1x32x32xbf16> to vector<32x32xbf16>
    %cst_46 = arith.constant dense<0.000000e+00> : vector<8x32xf32>
    %120 = tpu.matmul %117, %119, %cst_46 {dimension_numbers = #tpu.dot_dimension_numbers<[1], [0], [0], [1], [0, 0, 1, 1], [], []>} : vector<8x32xbf16>, vector<32x32xbf16>, vector<8x32xf32> -> vector<8x32xf32>
    %121 = arith.addf %4, %120 : vector<8x32xf32>
    %c0_47 = arith.constant 0 : index
    %c0_48 = arith.constant 0 : index
    %c0_49 = arith.constant 0 : index
    %122 = vector.load %arg8[%c0_47, %c0_48, %c0_49] : memref<1x1x32xf32, #tpu.memory_space<vmem>>, vector<1x1x32xf32>
    %123 = vector.shape_cast %122 : vector<1x1x32xf32> to vector<1x32xf32>
    %124 = vector.broadcast %123 : vector<1x32xf32> to vector<8x32xf32>
    %125 = arith.addf %121, %124 : vector<8x32xf32>
    %c0_50 = arith.constant 0 : index
    %c0_51 = arith.constant 0 : index
    %c0_52 = arith.constant 0 : index
    %126 = vector.load %arg9[%c0_50, %c0_51, %c0_52] : memref<1x1x32xf32, #tpu.memory_space<vmem>>, vector<1x1x32xf32>
    %127 = vector.shape_cast %126 : vector<1x1x32xf32> to vector<1x32xf32>
    %c0_53 = arith.constant 0 : index
    %c0_54 = arith.constant 0 : index
    %c0_55 = arith.constant 0 : index
    %128 = vector.load %arg10[%c0_53, %c0_54, %c0_55] : memref<1x1x32xf32, #tpu.memory_space<vmem>>, vector<1x1x32xf32>
    %129 = vector.shape_cast %128 : vector<1x1x32xf32> to vector<1x32xf32>
    %cst_56 = arith.constant dense<0.000000e+00> : vector<8xf32>
    %130 = vector.multi_reduction <add>, %125, %cst_56 [1] : vector<8x32xf32> to vector<8xf32>
    %131 = vector.shape_cast %130 : vector<8xf32> to vector<8x1xf32>
    %cst_57 = arith.constant 3.200000e+01 : f32
    %132 = vector.broadcast %cst_57 : f32 to vector<8x1xf32>
    %133 = arith.divf %131, %132 : vector<8x1xf32>
    %134 = vector.broadcast %133 : vector<8x1xf32> to vector<8x32xf32>
    %135 = arith.subf %125, %134 : vector<8x32xf32>
    %136 = arith.mulf %135, %135 : vector<8x32xf32>
    %cst_58 = arith.constant dense<0.000000e+00> : vector<8xf32>
    %137 = vector.multi_reduction <add>, %136, %cst_58 [1] : vector<8x32xf32> to vector<8xf32>
    %138 = vector.shape_cast %137 : vector<8xf32> to vector<8x1xf32>
    %cst_59 = arith.constant 3.200000e+01 : f32
    %139 = vector.broadcast %cst_59 : f32 to vector<8x1xf32>
    %140 = arith.divf %138, %139 : vector<8x1xf32>
    %141 = vector.broadcast %133 : vector<8x1xf32> to vector<8x32xf32>
    %142 = arith.subf %125, %141 : vector<8x32xf32>
    %cst_60 = arith.constant 9.99999974E-6 : f32
    %143 = vector.broadcast %cst_60 : f32 to vector<8x1xf32>
    %144 = arith.addf %140, %143 : vector<8x1xf32>
    %145 = math.rsqrt %144 : vector<8x1xf32>
    %146 = vector.broadcast %145 : vector<8x1xf32> to vector<8x32xf32>
    %147 = arith.mulf %142, %146 : vector<8x32xf32>
    %148 = vector.broadcast %127 : vector<1x32xf32> to vector<8x32xf32>
    %149 = arith.mulf %147, %148 : vector<8x32xf32>
    %150 = vector.broadcast %129 : vector<1x32xf32> to vector<8x32xf32>
    %151 = arith.addf %149, %150 : vector<8x32xf32>
    %152 = arith.truncf %151 : vector<8x32xf32> to vector<8x32xbf16>
    %cst_61 = arith.constant 0.000000e+00 : f32
    %153 = vector.broadcast %cst_61 : f32 to vector<8x32xf32>
    %c0_62 = arith.constant 0 : index
    %c0_63 = arith.constant 0 : index
    %c0_64 = arith.constant 0 : index
    %154 = vector.load %arg11[%c0_62, %c0_63, %c0_64] : memref<1x32x128xbf16, #tpu.memory_space<vmem>>, vector<1x32x128xbf16>
    %155 = vector.shape_cast %154 : vector<1x32x128xbf16> to vector<32x128xbf16>
    %c0_65 = arith.constant 0 : index
    %c0_66 = arith.constant 0 : index
    %c0_67 = arith.constant 0 : index
    %156 = vector.load %arg12[%c0_65, %c0_66, %c0_67] : memref<1x1x128xf32, #tpu.memory_space<vmem>>, vector<1x1x128xf32>
    %157 = vector.shape_cast %156 : vector<1x1x128xf32> to vector<1x128xf32>
    %c0_68 = arith.constant 0 : index
    %c0_69 = arith.constant 0 : index
    %c0_70 = arith.constant 0 : index
    %158 = vector.load %arg13[%c0_68, %c0_69, %c0_70] : memref<1x128x32xbf16, #tpu.memory_space<vmem>>, vector<1x128x32xbf16>
    %159 = vector.shape_cast %158 : vector<1x128x32xbf16> to vector<128x32xbf16>
    %cst_71 = arith.constant dense<0.000000e+00> : vector<8x128xf32>
    %160 = tpu.matmul %152, %155, %cst_71 {dimension_numbers = #tpu.dot_dimension_numbers<[1], [0], [0], [1], [0, 0, 1, 1], [], []>} : vector<8x32xbf16>, vector<32x128xbf16>, vector<8x128xf32> -> vector<8x128xf32>
    %161 = vector.broadcast %157 : vector<1x128xf32> to vector<8x128xf32>
    %162 = arith.addf %160, %161 : vector<8x128xf32>
    %cst_72 = arith.constant 5.000000e-01 : f32
    %163 = vector.broadcast %cst_72 : f32 to vector<8x128xf32>
    %164 = arith.mulf %163, %162 : vector<8x128xf32>
    %cst_73 = arith.constant 4.471500e-02 : f32
    %165 = vector.broadcast %cst_73 : f32 to vector<8x128xf32>
    %166 = arith.mulf %165, %162 : vector<8x128xf32>
    %167 = arith.mulf %166, %162 : vector<8x128xf32>
    %168 = arith.mulf %167, %162 : vector<8x128xf32>
    %169 = arith.addf %162, %168 : vector<8x128xf32>
    %cst_74 = arith.constant 0.797884583 : f32
    %170 = vector.broadcast %cst_74 : f32 to vector<8x128xf32>
    %171 = arith.mulf %170, %169 : vector<8x128xf32>
    %172 = math.tanh %171 : vector<8x128xf32>
    %cst_75 = arith.constant 1.000000e+00 : f32
    %173 = vector.broadcast %cst_75 : f32 to vector<8x128xf32>
    %174 = arith.addf %173, %172 : vector<8x128xf32>
    %175 = arith.mulf %164, %174 : vector<8x128xf32>
    %176 = arith.truncf %175 : vector<8x128xf32> to vector<8x128xbf16>
    %cst_76 = arith.constant dense<0.000000e+00> : vector<8x32xf32>
    %177 = tpu.matmul %176, %159, %cst_76 {dimension_numbers = #tpu.dot_dimension_numbers<[1], [0], [0], [1], [0, 0, 1, 1], [], []>} : vector<8x128xbf16>, vector<128x32xbf16>, vector<8x32xf32> -> vector<8x32xf32>
    %178 = arith.addf %153, %177 : vector<8x32xf32>
    %179 = arith.addf %125, %178 : vector<8x32xf32>
    %c0_77 = arith.constant 0 : index
    %c0_78 = arith.constant 0 : index
    %c0_79 = arith.constant 0 : index
    %180 = vector.load %arg14[%c0_77, %c0_78, %c0_79] : memref<1x1x32xf32, #tpu.memory_space<vmem>>, vector<1x1x32xf32>
    %181 = vector.shape_cast %180 : vector<1x1x32xf32> to vector<1x32xf32>
    %182 = vector.broadcast %181 : vector<1x32xf32> to vector<8x32xf32>
    %183 = arith.addf %179, %182 : vector<8x32xf32>
    %184 = vector.shape_cast %183 : vector<8x32xf32> to vector<1x8x32xf32>
    %c0_80 = arith.constant 0 : index
    %c0_81 = arith.constant 0 : index
    %c0_82 = arith.constant 0 : index
    %185 = vector.load %arg16[%c0_80, %c0_81, %c0_82] : memref<1x8x32xf32, #tpu.memory_space<vmem>>, vector<1x8x32xf32>
    tpu.vector_store %arg16[%c0_80, %c0_81, %c0_82], %184 {strides = array<i32>} : memref<1x8x32xf32, #tpu.memory_space<vmem>>, vector<1x8x32xf32>,
    %c1_i32 = arith.constant 1 : i32
    %186 = arith.cmpi eq, %arg1, %c1_i32 : i32
    %187 = arith.extui %186 : i1 to i32
    %c0_i32_83 = arith.constant 0 : i32
    %188 = arith.cmpi ne, %187, %c0_i32_83 : i32
    scf.if %188 {
      %c0_84 = arith.constant 0 : index
      %c0_85 = arith.constant 0 : index
      %c0_86 = arith.constant 0 : index
      %189 = vector.load %arg16[%c0_84, %c0_85, %c0_86] : memref<1x8x32xf32, #tpu.memory_space<vmem>>, vector<1x8x32xf32>
      %c0_87 = arith.constant 0 : index
      %c0_88 = arith.constant 0 : index
      %c0_89 = arith.constant 0 : index
      %190 = vector.load %arg15[%c0_87, %c0_88, %c0_89] : memref<1x8x32xf32, #tpu.memory_space<vmem>>, vector<1x8x32xf32>
      tpu.vector_store %arg15[%c0_87, %c0_88, %c0_89], %189 {strides = array<i32>} : memref<1x8x32xf32, #tpu.memory_space<vmem>>, vector<1x8x32xf32>,
    } else {
    }
    return
  }
  func.func @transform_0(%arg0: i32, %arg1: i32) -> (i32, i32, i32) {
    %c0_i32 = arith.constant 0 : i32
    %c0_i32_0 = arith.constant 0 : i32
    %c0_i32_1 = arith.constant 0 : i32
    return %arg0, %c0_i32, %c0_i32_0 : i32, i32, i32
  }
  func.func @transform_1(%arg0: i32, %arg1: i32) -> (i32, i32, i32) {
    %c0_i32 = arith.constant 0 : i32
    %c0_i32_0 = arith.constant 0 : i32
    %c0_i32_1 = arith.constant 0 : i32
    return %arg1, %c0_i32, %c0_i32_0 : i32, i32, i32
  }
  func.func @transform_2(%arg0: i32, %arg1: i32) -> (i32, i32, i32) {
    %c0_i32 = arith.constant 0 : i32
    %c0_i32_0 = arith.constant 0 : i32
    %c0_i32_1 = arith.constant 0 : i32
    return %arg1, %c0_i32, %c0_i32_0 : i32, i32, i32
  }
  func.func @transform_3(%arg0: i32, %arg1: i32) -> (i32, i32, i32) {
    %c0_i32 = arith.constant 0 : i32
    %c0_i32_0 = arith.constant 0 : i32
    %c0_i32_1 = arith.constant 0 : i32
    return %arg1, %c0_i32, %c0_i32_0 : i32, i32, i32
  }
  func.func @transform_4(%arg0: i32, %arg1: i32) -> (i32, i32, i32) {
    %c0_i32 = arith.constant 0 : i32
    %c0_i32_0 = arith.constant 0 : i32
    %c0_i32_1 = arith.constant 0 : i32
    return %arg1, %c0_i32, %c0_i32_0 : i32, i32, i32
  }
  func.func @transform_5(%arg0: i32, %arg1: i32) -> (i32, i32, i32) {
    %c0_i32 = arith.constant 0 : i32
    %c0_i32_0 = arith.constant 0 : i32
    %c0_i32_1 = arith.constant 0 : i32
    return %arg1, %c0_i32, %c0_i32_0 : i32, i32, i32
  }
  func.func @transform_6(%arg0: i32, %arg1: i32) -> (i32, i32, i32) {
    %c0_i32 = arith.constant 0 : i32
    %c0_i32_0 = arith.constant 0 : i32
    %c0_i32_1 = arith.constant 0 : i32
    return %arg1, %c0_i32, %c0_i32_0 : i32, i32, i32
  }
  func.func @transform_7(%arg0: i32, %arg1: i32) -> (i32, i32, i32) {
    %c0_i32 = arith.constant 0 : i32
    %c0_i32_0 = arith.constant 0 : i32
    %c0_i32_1 = arith.constant 0 : i32
    return %arg1, %c0_i32, %c0_i32_0 : i32, i32, i32
  }
  func.func @transform_8(%arg0: i32, %arg1: i32) -> (i32, i32, i32) {
    %c0_i32 = arith.constant 0 : i32
    %c0_i32_0 = arith.constant 0 : i32
    %c0_i32_1 = arith.constant 0 : i32
    return %arg1, %c0_i32, %c0_i32_0 : i32, i32, i32
  }
  func.func @transform_9(%arg0: i32, %arg1: i32) -> (i32, i32, i32) {
    %c0_i32 = arith.constant 0 : i32
    %c0_i32_0 = arith.constant 0 : i32
    %c0_i32_1 = arith.constant 0 : i32
    return %arg1, %c0_i32, %c0_i32_0 : i32, i32, i32
  }
  func.func @transform_10(%arg0: i32, %arg1: i32) -> (i32, i32, i32) {
    %c0_i32 = arith.constant 0 : i32
    %c0_i32_0 = arith.constant 0 : i32
    %c0_i32_1 = arith.constant 0 : i32
    return %arg1, %c0_i32, %c0_i32_0 : i32, i32, i32
  }
  func.func @transform_11(%arg0: i32, %arg1: i32) -> (i32, i32, i32) {
    %c0_i32 = arith.constant 0 : i32
    %c0_i32_0 = arith.constant 0 : i32
    %c0_i32_1 = arith.constant 0 : i32
    return %arg1, %c0_i32, %c0_i32_0 : i32, i32, i32
  }
  func.func @transform_12(%arg0: i32, %arg1: i32) -> (i32, i32, i32) {
    %c0_i32 = arith.constant 0 : i32
    %c0_i32_0 = arith.constant 0 : i32
    %c0_i32_1 = arith.constant 0 : i32
    return %arg1, %c0_i32, %c0_i32_0 : i32, i32, i32
  }
  func.func @transform_13(%arg0: i32, %arg1: i32) -> (i32, i32, i32) {
    %c0_i32 = arith.constant 0 : i32
    %c0_i32_0 = arith.constant 0 : i32
    %c0_i32_1 = arith.constant 0 : i32
    return %arg0, %c0_i32, %c0_i32_0 : i32, i32, i32
  }
}

</mosaic_0001>

<llo_original>
// kernel: tpu_custom_call.1
$region0: #{tpu_custom_call.1}
  #allocation0 [shape = 'u32[]', space=smem, size = 0x4, offset = 0x4, fixed_abs, tag = 'smem constant byte address 0x4 - core index']
  #allocation1 [shape = 'u32[144,128]{1,0:T(1,128)}', space=vmem, size = 0x12000, scoped, tag = 'internal scratch']
  #allocation2 [shape = 'f32[1,8,32]{2,1,0:T(8,128)}', space=vmem, size = 0x1000, scoped, tag = 'scratch operand']
  #allocation3 [shape = 'bf16[8,32]{1,0:T(8,128)(2,1)}', space=vmem, size = 0x800, scoped, tag = 'scratch operand']
  %s0 = inlined_call_operand.vmem [shape: f32[2,8,32], index: 0, kind: input, shape index: {}]
  %s1 = inlined_call_operand.vmem [shape: f32[2,1,32], index: 1, kind: input, shape index: {}]
  %s2 = inlined_call_operand.vmem [shape: f32[2,1,32], index: 2, kind: input, shape index: {}]
  %s3 = inlined_call_operand.vmem [shape: bf16[2,32,96], index: 3, kind: input, shape index: {}]
  %s4 = inlined_call_operand.vmem [shape: f32[2,1,96], index: 4, kind: input, shape index: {}]
  %s5 = inlined_call_operand.vmem [shape: bf16[2,32,32], index: 5, kind: input, shape index: {}]
  %s6 = inlined_call_operand.vmem [shape: f32[2,1,32], index: 6, kind: input, shape index: {}]
  %s7 = inlined_call_operand.vmem [shape: f32[2,1,32], index: 7, kind: input, shape index: {}]
  %s8 = inlined_call_operand.vmem [shape: f32[2,1,32], index: 8, kind: input, shape index: {}]
  %s9 = inlined_call_operand.vmem [shape: bf16[2,32,128], index: 9, kind: input, shape index: {}]
  %s10 = inlined_call_operand.vmem [shape: f32[2,1,128], index: 10, kind: input, shape index: {}]
  %s11 = inlined_call_operand.vmem [shape: bf16[2,128,32], index: 11, kind: input, shape index: {}]
  %s12 = inlined_call_operand.vmem [shape: f32[2,1,32], index: 12, kind: input, shape index: {}]
  %s13 = inlined_call_operand.hbm [shape: f32[2,8,32], index: 13, kind: output, shape index: {}]
  %s14 = sld [smem:[#allocation0]]
  $region93: #{tpu_custom_call.1} parent=0
    _
  %s16 = ssub.s32 1, %s14
  %s17 = scalar_select 0, %s16, %s14
  $region1: #{tpu_custom_call.1} parent=0
    #allocation4 [shape = 'u8[8192]{0}', space=vmem, size = 0x2000, scoped, tag = 'output window, operand 0']
    #allocation5 [shape = 's32[2]{0}', space=sflag, size = 0x8, scoped, tag = 'scoped memory for tpu_custom_call.1']
    %18 = vsyncpa [#allocation5], 0
    %s19 = scalar_lea.sflag [#allocation5], 1
    %20 = vsyncpa %s19, 0
    loop: start=0, step=1, limit=6
    $region2: #{tpu_custom_call.1} parent=1 // loop_pre_header
      _
    $region3: #{tpu_custom_call.1} parent=1 // loop_header
      %s22 = sphi 0, %s26
      %p23 = scmp.ge.s32.totalorder %s22, 6
      %s29 = sphi 0, %s41
      %s30 = sphi 0, %s37
      %s31 = sphi 0, %s29
      %s32 = sphi 0, %s30
      %s33 = sphi 0, %s31
      %s34 = sphi 0, %s32
      %s44 = sphi 0, %s46
      %s47 = sphi 0, %s44
      %s48 = sphi 0, %s47
      %s64 = sphi 0, %s48
      %s70 = sphi 0, %s72
      %s73 = sphi 0, %s70
      %s74 = sphi 0, %s73
      %s90 = sphi 0, %s74
      %s96 = sphi 0, %s98
      %s99 = sphi 0, %s96
      %s100 = sphi 0, %s99
      %s116 = sphi 0, %s100
      %s122 = sphi 0, %s124
      %s125 = sphi 0, %s122
      %s126 = sphi 0, %s125
      %s142 = sphi 0, %s126
      %s148 = sphi 0, %s150
      %s151 = sphi 0, %s148
      %s152 = sphi 0, %s151
      %s168 = sphi 0, %s152
      %s174 = sphi 0, %s176
      %s177 = sphi 0, %s174
      %s178 = sphi 0, %s177
      %s194 = sphi 0, %s178
      %s200 = sphi 0, %s202
      %s203 = sphi 0, %s200
      %s204 = sphi 0, %s203
      %s220 = sphi 0, %s204
      %s226 = sphi 0, %s228
      %s229 = sphi 0, %s226
      %s230 = sphi 0, %s229
      %s246 = sphi 0, %s230
      %s252 = sphi 0, %s254
      %s255 = sphi 0, %s252
      %s256 = sphi 0, %s255
      %s272 = sphi 0, %s256
      %s278 = sphi 0, %s280
      %s281 = sphi 0, %s278
      %s282 = sphi 0, %s281
      %s298 = sphi 0, %s282
      %s304 = sphi 0, %s306
      %s307 = sphi 0, %s304
      %s308 = sphi 0, %s307
      %s324 = sphi 0, %s308
      %s330 = sphi 0, %s332
      %s333 = sphi 0, %s330
      %s334 = sphi 0, %s333
      %s350 = sphi 0, %s334
      %s356 = sphi 0, %s358
      %s359 = sphi 0, %s356
      %s360 = sphi 0, %s359
      %s376 = sphi 0, %s360
      %s382 = sphi 0, %s384
      %s385 = sphi 0, %s382
      %s386 = sphi 0, %s385
      %s402 = sphi 0, %s386
    $region4: #{tpu_custom_call.1} parent=1 // loop_header_branch
      %25 = sbr.rel (%p23) target = $region8
    $region5: #{tpu_custom_call.1} parent=1 // loop_body
      %s27 = ssub.s32 %s22, 1
      %s28 = ssub.s32 %s22, 2
      %s35 = sadd.s32 1, %s30
      %p36 = scmp.ge.s32.totalorder %s35, 2
      %s37 = scalar_select %p36, 0, %s35
      %s38 = sadd.s32 1, %s29
      %s39 = scalar_select %p36, %s38, %s29
      %p40 = scmp.ge.s32.totalorder %s39, 2
      %s41 = scalar_select %p40, 0, %s39
      %s42 = ssub.s32 %s29, %s41
      %p43 = scmp.eq.s32.totalorder %s42, 0
      %s45 = sadd.s32 %s44, 1
      %s46 = scalar_select %p43, %s44, %s45
      %p49 = pneg %p43
      %p50 = scmp.eq.s32.totalorder %s22, 3
      %p51 = por %p49, %p50
      %p52 = scmp.ne.s32.totalorder %s44, %s47
      %p53 = scmp.eq.s32.totalorder %s22, 0
      %p54 = por %p52, %p53
      %p55 = scmp.ne.s32.totalorder %s44, %s47
      %p56 = scmp.eq.s32.totalorder %s27, 3
      %p57 = por %p55, %p56
      %p58 = scmp.ne.s32.totalorder %s47, %s48
      %p59 = scmp.eq.s32.totalorder %s27, 0
      %p60 = por %p58, %p59
      %p61 = scmp.ne.s32.totalorder %s47, %s48
      %p62 = scmp.eq.s32.totalorder %s28, 3
      %p63 = por %p61, %p62
      %p65 = scmp.ne.s32.totalorder %s48, %s64
      %p66 = scmp.eq.s32.totalorder %s28, 0
      %p67 = por %p65, %p66
      %s68 = ssub.s32 %s30, %s37
      %p69 = scmp.eq.s32.totalorder %s68, 0
      %s71 = sadd.s32 %s70, 1
      %s72 = scalar_select %p69, %s70, %s71
      %p75 = pneg %p69
      %p76 = scmp.eq.s32.totalorder %s22, 3
      %p77 = por %p75, %p76
      %p78 = scmp.ne.s32.totalorder %s70, %s73
      %p79 = scmp.eq.s32.totalorder %s22, 0
      %p80 = por %p78, %p79
      %p81 = scmp.ne.s32.totalorder %s70, %s73
      %p82 = scmp.eq.s32.totalorder %s27, 3
      %p83 = por %p81, %p82
      %p84 = scmp.ne.s32.totalorder %s73, %s74
      %p85 = scmp.eq.s32.totalorder %s27, 0
      %p86 = por %p84, %p85
      %p87 = scmp.ne.s32.totalorder %s73, %s74
      %p88 = scmp.eq.s32.totalorder %s28, 3
      %p89 = por %p87, %p88
      %p91 = scmp.ne.s32.totalorder %s74, %s90
      %p92 = scmp.eq.s32.totalorder %s28, 0
      %p93 = por %p91, %p92
      %s94 = ssub.s32 %s30, %s37
      %p95 = scmp.eq.s32.totalorder %s94, 0
      %s97 = sadd.s32 %s96, 1
      %s98 = scalar_select %p95, %s96, %s97
      %p101 = pneg %p95
      %p102 = scmp.eq.s32.totalorder %s22, 3
      %p103 = por %p101, %p102
      %p104 = scmp.ne.s32.totalorder %s96, %s99
      %p105 = scmp.eq.s32.totalorder %s22, 0
      %p106 = por %p104, %p105
      %p107 = scmp.ne.s32.totalorder %s96, %s99
      %p108 = scmp.eq.s32.totalorder %s27, 3
      %p109 = por %p107, %p108
      %p110 = scmp.ne.s32.totalorder %s99, %s100
      %p111 = scmp.eq.s32.totalorder %s27, 0
      %p112 = por %p110, %p111
      %p113 = scmp.ne.s32.totalorder %s99, %s100
      %p114 = scmp.eq.s32.totalorder %s28, 3
      %p115 = por %p113, %p114
      %p117 = scmp.ne.s32.totalorder %s100, %s116
      %p118 = scmp.eq.s32.totalorder %s28, 0
      %p119 = por %p117, %p118
      %s120 = ssub.s32 %s30, %s37
      %p121 = scmp.eq.s32.totalorder %s120, 0
      %s123 = sadd.s32 %s122, 1
      %s124 = scalar_select %p121, %s122, %s123
      %p127 = pneg %p121
      %p128 = scmp.eq.s32.totalorder %s22, 3
      %p129 = por %p127, %p128
      %p130 = scmp.ne.s32.totalorder %s122, %s125
      %p131 = scmp.eq.s32.totalorder %s22, 0
      %p132 = por %p130, %p131
      %p133 = scmp.ne.s32.totalorder %s122, %s125
      %p134 = scmp.eq.s32.totalorder %s27, 3
      %p135 = por %p133, %p134
      %p136 = scmp.ne.s32.totalorder %s125, %s126
      %p137 = scmp.eq.s32.totalorder %s27, 0
      %p138 = por %p136, %p137
      %p139 = scmp.ne.s32.totalorder %s125, %s126
      %p140 = scmp.eq.s32.totalorder %s28, 3
      %p141 = por %p139, %p140
      %p143 = scmp.ne.s32.totalorder %s126, %s142
      %p144 = scmp.eq.s32.totalorder %s28, 0
      %p145 = por %p143, %p144
      %s146 = ssub.s32 %s30, %s37
      %p147 = scmp.eq.s32.totalorder %s146, 0
      %s149 = sadd.s32 %s148, 1
      %s150 = scalar_select %p147, %s148, %s149
      %p153 = pneg %p147
      %p154 = scmp.eq.s32.totalorder %s22, 3
      %p155 = por %p153, %p154
      %p156 = scmp.ne.s32.totalorder %s148, %s151
      %p157 = scmp.eq.s32.totalorder %s22, 0
      %p158 = por %p156, %p157
      %p159 = scmp.ne.s32.totalorder %s148, %s151
      %p160 = scmp.eq.s32.totalorder %s27, 3
      %p161 = por %p159, %p160
      %p162 = scmp.ne.s32.totalorder %s151, %s152
      %p163 = scmp.eq.s32.totalorder %s27, 0
      %p164 = por %p162, %p163
      %p165 = scmp.ne.s32.totalorder %s151, %s152
      %p166 = scmp.eq.s32.totalorder %s28, 3
      %p167 = por %p165, %p166
      %p169 = scmp.ne.s32.totalorder %s152, %s168
      %p170 = scmp.eq.s32.totalorder %s28, 0
      %p171 = por %p169, %p170
      %s172 = ssub.s32 %s30, %s37
      %p173 = scmp.eq.s32.totalorder %s172, 0
      %s175 = sadd.s32 %s174, 1
      %s176 = scalar_select %p173, %s174, %s175
      %p179 = pneg %p173
      %p180 = scmp.eq.s32.totalorder %s22, 3
      %p181 = por %p179, %p180
      %p182 = scmp.ne.s32.totalorder %s174, %s177
      %p183 = scmp.eq.s32.totalorder %s22, 0
      %p184 = por %p182, %p183
      %p185 = scmp.ne.s32.totalorder %s174, %s177
      %p186 = scmp.eq.s32.totalorder %s27, 3
      %p187 = por %p185, %p186
      %p188 = scmp.ne.s32.totalorder %s177, %s178
      %p189 = scmp.eq.s32.totalorder %s27, 0
      %p190 = por %p188, %p189
      %p191 = scmp.ne.s32.totalorder %s177, %s178
      %p192 = scmp.eq.s32.totalorder %s28, 3
      %p193 = por %p191, %p192
      %p195 = scmp.ne.s32.totalorder %s178, %s194
      %p196 = scmp.eq.s32.totalorder %s28, 0
      %p197 = por %p195, %p196
      %s198 = ssub.s32 %s30, %s37
      %p199 = scmp.eq.s32.totalorder %s198, 0
      %s201 = sadd.s32 %s200, 1
      %s202 = scalar_select %p199, %s200, %s201
      %p205 = pneg %p199
      %p206 = scmp.eq.s32.totalorder %s22, 3
      %p207 = por %p205, %p206
      %p208 = scmp.ne.s32.totalorder %s200, %s203
      %p209 = scmp.eq.s32.totalorder %s22, 0
      %p210 = por %p208, %p209
      %p211 = scmp.ne.s32.totalorder %s200, %s203
      %p212 = scmp.eq.s32.totalorder %s27, 3
      %p213 = por %p211, %p212
      %p214 = scmp.ne.s32.totalorder %s203, %s204
      %p215 = scmp.eq.s32.totalorder %s27, 0
      %p216 = por %p214, %p215
      %p217 = scmp.ne.s32.totalorder %s203, %s204
      %p218 = scmp.eq.s32.totalorder %s28, 3
      %p219 = por %p217, %p218
      %p221 = scmp.ne.s32.totalorder %s204, %s220
      %p222 = scmp.eq.s32.totalorder %s28, 0
      %p223 = por %p221, %p222
      %s224 = ssub.s32 %s30, %s37
      %p225 = scmp.eq.s32.totalorder %s224, 0
      %s227 = sadd.s32 %s226, 1
      %s228 = scalar_select %p225, %s226, %s227
      %p231 = pneg %p225
      %p232 = scmp.eq.s32.totalorder %s22, 3
      %p233 = por %p231, %p232
      %p234 = scmp.ne.s32.totalorder %s226, %s229
      %p235 = scmp.eq.s32.totalorder %s22, 0
      %p236 = por %p234, %p235
      %p237 = scmp.ne.s32.totalorder %s226, %s229
      %p238 = scmp.eq.s32.totalorder %s27, 3
      %p239 = por %p237, %p238
      %p240 = scmp.ne.s32.totalorder %s229, %s230
      %p241 = scmp.eq.s32.totalorder %s27, 0
      %p242 = por %p240, %p241
      %p243 = scmp.ne.s32.totalorder %s229, %s230
      %p244 = scmp.eq.s32.totalorder %s28, 3
      %p245 = por %p243, %p244
      %p247 = scmp.ne.s32.totalorder %s230, %s246
      %p248 = scmp.eq.s32.totalorder %s28, 0
      %p249 = por %p247, %p248
      %s250 = ssub.s32 %s30, %s37
      %p251 = scmp.eq.s32.totalorder %s250, 0
      %s253 = sadd.s32 %s252, 1
      %s254 = scalar_select %p251, %s252, %s253
      %p257 = pneg %p251
      %p258 = scmp.eq.s32.totalorder %s22, 3
      %p259 = por %p257, %p258
      %p260 = scmp.ne.s32.totalorder %s252, %s255
      %p261 = scmp.eq.s32.totalorder %s22, 0
      %p262 = por %p260, %p261
      %p263 = scmp.ne.s32.totalorder %s252, %s255
      %p264 = scmp.eq.s32.totalorder %s27, 3
      %p265 = por %p263, %p264
      %p266 = scmp.ne.s32.totalorder %s255, %s256
      %p267 = scmp.eq.s32.totalorder %s27, 0
      %p268 = por %p266, %p267
      %p269 = scmp.ne.s32.totalorder %s255, %s256
      %p270 = scmp.eq.s32.totalorder %s28, 3
      %p271 = por %p269, %p270
      %p273 = scmp.ne.s32.totalorder %s256, %s272
      %p274 = scmp.eq.s32.totalorder %s28, 0
      %p275 = por %p273, %p274
      %s276 = ssub.s32 %s30, %s37
      %p277 = scmp.eq.s32.totalorder %s276, 0
      %s279 = sadd.s32 %s278, 1
      %s280 = scalar_select %p277, %s278, %s279
      %p283 = pneg %p277
      %p284 = scmp.eq.s32.totalorder %s22, 3
      %p285 = por %p283, %p284
      %p286 = scmp.ne.s32.totalorder %s278, %s281
      %p287 = scmp.eq.s32.totalorder %s22, 0
      %p288 = por %p286, %p287
      %p289 = scmp.ne.s32.totalorder %s278, %s281
      %p290 = scmp.eq.s32.totalorder %s27, 3
      %p291 = por %p289, %p290
      %p292 = scmp.ne.s32.totalorder %s281, %s282
      %p293 = scmp.eq.s32.totalorder %s27, 0
      %p294 = por %p292, %p293
      %p295 = scmp.ne.s32.totalorder %s281, %s282
      %p296 = scmp.eq.s32.totalorder %s28, 3
      %p297 = por %p295, %p296
      %p299 = scmp.ne.s32.totalorder %s282, %s298
      %p300 = scmp.eq.s32.totalorder %s28, 0
      %p301 = por %p299, %p300
      %s302 = ssub.s32 %s30, %s37
      %p303 = scmp.eq.s32.totalorder %s302, 0
      %s305 = sadd.s32 %s304, 1
      %s306 = scalar_select %p303, %s304, %s305
      %p309 = pneg %p303
      %p310 = scmp.eq.s32.totalorder %s22, 3
      %p311 = por %p309, %p310
      %p312 = scmp.ne.s32.totalorder %s304, %s307
      %p313 = scmp.eq.s32.totalorder %s22, 0
      %p314 = por %p312, %p313
      %p315 = scmp.ne.s32.totalorder %s304, %s307
      %p316 = scmp.eq.s32.totalorder %s27, 3
      %p317 = por %p315, %p316
      %p318 = scmp.ne.s32.totalorder %s307, %s308
      %p319 = scmp.eq.s32.totalorder %s27, 0
      %p320 = por %p318, %p319
      %p321 = scmp.ne.s32.totalorder %s307, %s308
      %p322 = scmp.eq.s32.totalorder %s28, 3
      %p323 = por %p321, %p322
      %p325 = scmp.ne.s32.totalorder %s308, %s324
      %p326 = scmp.eq.s32.totalorder %s28, 0
      %p327 = por %p325, %p326
      %s328 = ssub.s32 %s30, %s37
      %p329 = scmp.eq.s32.totalorder %s328, 0
      %s331 = sadd.s32 %s330, 1
      %s332 = scalar_select %p329, %s330, %s331
      %p335 = pneg %p329
      %p336 = scmp.eq.s32.totalorder %s22, 3
      %p337 = por %p335, %p336
      %p338 = scmp.ne.s32.totalorder %s330, %s333
      %p339 = scmp.eq.s32.totalorder %s22, 0
      %p340 = por %p338, %p339
      %p341 = scmp.ne.s32.totalorder %s330, %s333
      %p342 = scmp.eq.s32.totalorder %s27, 3
      %p343 = por %p341, %p342
      %p344 = scmp.ne.s32.totalorder %s333, %s334
      %p345 = scmp.eq.s32.totalorder %s27, 0
      %p346 = por %p344, %p345
      %p347 = scmp.ne.s32.totalorder %s333, %s334
      %p348 = scmp.eq.s32.totalorder %s28, 3
      %p349 = por %p347, %p348
      %p351 = scmp.ne.s32.totalorder %s334, %s350
      %p352 = scmp.eq.s32.totalorder %s28, 0
      %p353 = por %p351, %p352
      %s354 = ssub.s32 %s30, %s37
      %p355 = scmp.eq.s32.totalorder %s354, 0
      %s357 = sadd.s32 %s356, 1
      %s358 = scalar_select %p355, %s356, %s357
      %p361 = pneg %p355
      %p362 = scmp.eq.s32.totalorder %s22, 3
      %p363 = por %p361, %p362
      %p364 = scmp.ne.s32.totalorder %s356, %s359
      %p365 = scmp.eq.s32.totalorder %s22, 0
      %p366 = por %p364, %p365
      %p367 = scmp.ne.s32.totalorder %s356, %s359
      %p368 = scmp.eq.s32.totalorder %s27, 3
      %p369 = por %p367, %p368
      %p370 = scmp.ne.s32.totalorder %s359, %s360
      %p371 = scmp.eq.s32.totalorder %s27, 0
      %p372 = por %p370, %p371
      %p373 = scmp.ne.s32.totalorder %s359, %s360
      %p374 = scmp.eq.s32.totalorder %s28, 3
      %p375 = por %p373, %p374
      %p377 = scmp.ne.s32.totalorder %s360, %s376
      %p378 = scmp.eq.s32.totalorder %s28, 0
      %p379 = por %p377, %p378
      %s380 = ssub.s32 %s29, %s41
      %p381 = scmp.eq.s32.totalorder %s380, 0
      %s383 = sadd.s32 %s382, 1
      %s384 = scalar_select %p381, %s382, %s383
      %p387 = pneg %p381
      %p388 = scmp.eq.s32.totalorder %s22, 3
      %p389 = por %p387, %p388
      %p390 = scmp.ne.s32.totalorder %s382, %s385
      %p391 = scmp.eq.s32.totalorder %s22, 0
      %p392 = por %p390, %p391
      %p393 = scmp.ne.s32.totalorder %s382, %s385
      %p394 = scmp.eq.s32.totalorder %s27, 3
      %p395 = por %p393, %p394
      %p396 = scmp.ne.s32.totalorder %s385, %s386
      %p397 = scmp.eq.s32.totalorder %s27, 0
      %p398 = por %p396, %p397
      %p399 = scmp.ne.s32.totalorder %s385, %s386
      %p400 = scmp.eq.s32.totalorder %s28, 3
      %p401 = por %p399, %p400
      %p403 = scmp.ne.s32.totalorder %s386, %s402
      %p404 = scmp.eq.s32.totalorder %s28, 0
      %p405 = por %p403, %p404
      %p406 = scmp.le.s32.totalorder 1, %s22
      %p407 = scmp.lt.s32.totalorder %s22, 5
      %p408 = pnand %p406, %p407
      %p409 = pneg %p408
      // Predicated region
      $region9: #{tpu_custom_call.1} parent=5 // pred_check
        _
      $region10: #{tpu_custom_call.1} parent=5 // pred_check_branch
        %411 = sbr.rel (%p408) target = $region12
      $region11: #{tpu_custom_call.1} parent=5 // pred_region
        %s412 = ssub.s32 %s22, 1
      $region12: #{tpu_custom_call.1} parent=5 // pred_fallthru
        _
      %p413 = scmp.lt.s32.totalorder %s22, 4
      // Predicated region
      $region13: #{tpu_custom_call.1} parent=5 // pred_check
        %p414 = pneg %p413
      $region14: #{tpu_custom_call.1} parent=5 // pred_check_branch
        %416 = sbr.rel (%p414) target = $region16
      $region15: #{tpu_custom_call.1} parent=5 // pred_region
        // Predicated region
        $region17: #{tpu_custom_call.1} parent=15 // pred_check
          %p417 = pneg %p54
        $region18: #{tpu_custom_call.1} parent=15 // pred_check_branch
          %419 = sbr.rel (%p417) target = $region20
        $region19: #{tpu_custom_call.1} parent=15 // pred_region
          %p420 = scmp.lt.s32.totalorder %s29, 1
          %s421 = scalar_select %p420, %s29, 1
          %s422 = smul.addr %s421, 8
          %s423 = scalar_lea.vmem %s0, %s422
        $region20: #{tpu_custom_call.1} parent=15 // pred_fallthru
          _
        // Predicated region
        $region21: #{tpu_custom_call.1} parent=15 // pred_check
          %p424 = pneg %p80
        $region22: #{tpu_custom_call.1} parent=15 // pred_check_branch
          %426 = sbr.rel (%p424) target = $region24
        $region23: #{tpu_custom_call.1} parent=15 // pred_region
          %p427 = scmp.lt.s32.totalorder %s30, 1
          %s428 = scalar_select %p427, %s30, 1
          %s429 = scalar_lea.vmem %s1, %s428
        $region24: #{tpu_custom_call.1} parent=15 // pred_fallthru
          _
        // Predicated region
        $region25: #{tpu_custom_call.1} parent=15 // pred_check
          %p430 = pneg %p106
        $region26: #{tpu_custom_call.1} parent=15 // pred_check_branch
          %432 = sbr.rel (%p430) target = $region28
        $region27: #{tpu_custom_call.1} parent=15 // pred_region
          %p433 = scmp.lt.s32.totalorder %s30, 1
          %s434 = scalar_select %p433, %s30, 1
          %s435 = scalar_lea.vmem %s2, %s434
        $region28: #{tpu_custom_call.1} parent=15 // pred_fallthru
          _
        // Predicated region
        $region29: #{tpu_custom_call.1} parent=15 // pred_check
          %p436 = pneg %p132
        $region30: #{tpu_custom_call.1} parent=15 // pred_check_branch
          %438 = sbr.rel (%p436) target = $region32
        $region31: #{tpu_custom_call.1} parent=15 // pred_region
          %p439 = scmp.lt.s32.totalorder %s30, 1
          %s440 = scalar_select %p439, %s30, 1
          %s441 = smul.addr %s440, 4
          %s442 = smul.addr %s441, 4
          %s443 = scalar_lea.vmem %s3, %s442
        $region32: #{tpu_custom_call.1} parent=15 // pred_fallthru
          _
        // Predicated region
        $region33: #{tpu_custom_call.1} parent=15 // pred_check
          %p444 = pneg %p158
        $region34: #{tpu_custom_call.1} parent=15 // pred_check_branch
          %446 = sbr.rel (%p444) target = $region36
        $region35: #{tpu_custom_call.1} parent=15 // pred_region
          %p447 = scmp.lt.s32.totalorder %s30, 1
          %s448 = scalar_select %p447, %s30, 1
          %s449 = scalar_lea.vmem %s4, %s448
        $region36: #{tpu_custom_call.1} parent=15 // pred_fallthru
          _
        // Predicated region
        $region37: #{tpu_custom_call.1} parent=15 // pred_check
          %p450 = pneg %p184
        $region38: #{tpu_custom_call.1} parent=15 // pred_check_branch
          %452 = sbr.rel (%p450) target = $region40
        $region39: #{tpu_custom_call.1} parent=15 // pred_region
          %p453 = scmp.lt.s32.totalorder %s30, 1
          %s454 = scalar_select %p453, %s30, 1
          %s455 = smul.addr %s454, 4
          %s456 = smul.addr %s455, 4
          %s457 = scalar_lea.vmem %s5, %s456
        $region40: #{tpu_custom_call.1} parent=15 // pred_fallthru
          _
        // Predicated region
        $region41: #{tpu_custom_call.1} parent=15 // pred_check
          %p458 = pneg %p210
        $region42: #{tpu_custom_call.1} parent=15 // pred_check_branch
          %460 = sbr.rel (%p458) target = $region44
        $region43: #{tpu_custom_call.1} parent=15 // pred_region
          %p461 = scmp.lt.s32.totalorder %s30, 1
          %s462 = scalar_select %p461, %s30, 1
          %s463 = scalar_lea.vmem %s6, %s462
        $region44: #{tpu_custom_call.1} parent=15 // pred_fallthru
          _
        // Predicated region
        $region45: #{tpu_custom_call.1} parent=15 // pred_check
          %p464 = pneg %p236
        $region46: #{tpu_custom_call.1} parent=15 // pred_check_branch
          %466 = sbr.rel (%p464) target = $region48
        $region47: #{tpu_custom_call.1} parent=15 // pred_region
          %p467 = scmp.lt.s32.totalorder %s30, 1
          %s468 = scalar_select %p467, %s30, 1
          %s469 = scalar_lea.vmem %s7, %s468
        $region48: #{tpu_custom_call.1} parent=15 // pred_fallthru
          _
        // Predicated region
        $region49: #{tpu_custom_call.1} parent=15 // pred_check
          %p470 = pneg %p262
        $region50: #{tpu_custom_call.1} parent=15 // pred_check_branch
          %472 = sbr.rel (%p470) target = $region52
        $region51: #{tpu_custom_call.1} parent=15 // pred_region
          %p473 = scmp.lt.s32.totalorder %s30, 1
          %s474 = scalar_select %p473, %s30, 1
          %s475 = scalar_lea.vmem %s8, %s474
        $region52: #{tpu_custom_call.1} parent=15 // pred_fallthru
          _
        // Predicated region
        $region53: #{tpu_custom_call.1} parent=15 // pred_check
          %p476 = pneg %p288
        $region54: #{tpu_custom_call.1} parent=15 // pred_check_branch
          %478 = sbr.rel (%p476) target = $region56
        $region55: #{tpu_custom_call.1} parent=15 // pred_region
          %p479 = scmp.lt.s32.totalorder %s30, 1
          %s480 = scalar_select %p479, %s30, 1
          %s481 = smul.addr %s480, 4
          %s482 = smul.addr %s481, 4
          %s483 = scalar_lea.vmem %s9, %s482
        $region56: #{tpu_custom_call.1} parent=15 // pred_fallthru
          _
        // Predicated region
        $region57: #{tpu_custom_call.1} parent=15 // pred_check
          %p484 = pneg %p314
        $region58: #{tpu_custom_call.1} parent=15 // pred_check_branch
          %486 = sbr.rel (%p484) target = $region60
        $region59: #{tpu_custom_call.1} parent=15 // pred_region
          %p487 = scmp.lt.s32.totalorder %s30, 1
          %s488 = scalar_select %p487, %s30, 1
          %s489 = scalar_lea.vmem %s10, %s488
        $region60: #{tpu_custom_call.1} parent=15 // pred_fallthru
          _
        // Predicated region
        $region61: #{tpu_custom_call.1} parent=15 // pred_check
          %p490 = pneg %p340
        $region62: #{tpu_custom_call.1} parent=15 // pred_check_branch
          %492 = sbr.rel (%p490) target = $region64
        $region63: #{tpu_custom_call.1} parent=15 // pred_region
          %p493 = scmp.lt.s32.totalorder %s30, 1
          %s494 = scalar_select %p493, %s30, 1
          %s495 = smul.addr %s494, 16
          %s496 = smul.addr %s495, 4
          %s497 = scalar_lea.vmem %s11, %s496
        $region64: #{tpu_custom_call.1} parent=15 // pred_fallthru
          _
        // Predicated region
        $region65: #{tpu_custom_call.1} parent=15 // pred_check
          %p498 = pneg %p366
        $region66: #{tpu_custom_call.1} parent=15 // pred_check_branch
          %500 = sbr.rel (%p498) target = $region68
        $region67: #{tpu_custom_call.1} parent=15 // pred_region
          %p501 = scmp.lt.s32.totalorder %s30, 1
          %s502 = scalar_select %p501, %s30, 1
          %s503 = scalar_lea.vmem %s12, %s502
        $region68: #{tpu_custom_call.1} parent=15 // pred_fallthru
          _
      $region16: #{tpu_custom_call.1} parent=5 // pred_fallthru
        _
      %p504 = scmp.le.s32.totalorder 1, %s22
      %p505 = scmp.lt.s32.totalorder %s22, 5
      %p506 = pnand %p504, %p505
      %p507 = pneg %p506
      // Predicated region
      $region69: #{tpu_custom_call.1} parent=5 // pred_check
        _
      $region70: #{tpu_custom_call.1} parent=5 // pred_check_branch
        %509 = sbr.rel (%p506) target = $region72
      $region71: #{tpu_custom_call.1} parent=5 // pred_region
        %s510 = ssub.s32 %s22, 1
        %p511 = scmp.lt.s32.totalorder %s31, 1
        %s512 = scalar_select %p511, %s31, 1
        %s513 = smul.addr %s512, 8
        %s514 = scalar_lea.vmem %s0, %s513
        %p515 = pneg %p60
        %p516 = pneg %p57
        %p517 = scmp.lt.s32.totalorder %s32, 1
        %s518 = scalar_select %p517, %s32, 1
        %s519 = scalar_lea.vmem %s1, %s518
        %p520 = pneg %p86
        %p521 = pneg %p83
        %p522 = scmp.lt.s32.totalorder %s32, 1
        %s523 = scalar_select %p522, %s32, 1
        %s524 = scalar_lea.vmem %s2, %s523
        %p525 = pneg %p112
        %p526 = pneg %p109
        %p527 = scmp.lt.s32.totalorder %s32, 1
        %s528 = scalar_select %p527, %s32, 1
        %s529 = smul.addr %s528, 4
        %s530 = smul.addr %s529, 4
        %s531 = scalar_lea.vmem %s3, %s530
        %p532 = pneg %p138
        %p533 = pneg %p135
        %p534 = scmp.lt.s32.totalorder %s32, 1
        %s535 = scalar_select %p534, %s32, 1
        %s536 = scalar_lea.vmem %s4, %s535
        %p537 = pneg %p164
        %p538 = pneg %p161
        %p539 = scmp.lt.s32.totalorder %s32, 1
        %s540 = scalar_select %p539, %s32, 1
        %s541 = smul.addr %s540, 4
        %s542 = smul.addr %s541, 4
        %s543 = scalar_lea.vmem %s5, %s542
        %p544 = pneg %p190
        %p545 = pneg %p187
        %p546 = scmp.lt.s32.totalorder %s32, 1
        %s547 = scalar_select %p546, %s32, 1
        %s548 = scalar_lea.vmem %s6, %s547
        %p549 = pneg %p216
        %p550 = pneg %p213
        %p551 = scmp.lt.s32.totalorder %s32, 1
        %s552 = scalar_select %p551, %s32, 1
        %s553 = scalar_lea.vmem %s7, %s552
        %p554 = pneg %p242
        %p555 = pneg %p239
        %p556 = scmp.lt.s32.totalorder %s32, 1
        %s557 = scalar_select %p556, %s32, 1
        %s558 = scalar_lea.vmem %s8, %s557
        %p559 = pneg %p268
        %p560 = pneg %p265
        %p561 = scmp.lt.s32.totalorder %s32, 1
        %s562 = scalar_select %p561, %s32, 1
        %s563 = smul.addr %s562, 4
        %s564 = smul.addr %s563, 4
        %s565 = scalar_lea.vmem %s9, %s564
        %p566 = pneg %p294
        %p567 = pneg %p291
        %p568 = scmp.lt.s32.totalorder %s32, 1
        %s569 = scalar_select %p568, %s32, 1
        %s570 = scalar_lea.vmem %s10, %s569
        %p571 = pneg %p320
        %p572 = pneg %p317
        %p573 = scmp.lt.s32.totalorder %s32, 1
        %s574 = scalar_select %p573, %s32, 1
        %s575 = smul.addr %s574, 16
        %s576 = smul.addr %s575, 4
        %s577 = scalar_lea.vmem %s11, %s576
        %p578 = pneg %p346
        %p579 = pneg %p343
        %p580 = scmp.lt.s32.totalorder %s32, 1
        %s581 = scalar_select %p580, %s32, 1
        %s582 = scalar_lea.vmem %s12, %s581
        %p583 = pneg %p372
        %p584 = pneg %p369
        %p585 = pneg %p398
        %p586 = pneg %p395
        %s587 = sand.u32 %s385, 1
        %s588 = scalar_lea.sflag [#allocation5], %s587
        %s589 = sand.u32 %s385, 1
        %s590 = smul.addr %s589, 8
        %s591 = scalar_lea.vmem [#allocation4], %s590
        %p592 = scmp.lt.s32.totalorder %s31, 1
        %s593 = scalar_select %p592, %s31, 1
        %s594 = smul.addr %s593, 8
        %s595 = scalar_lea.vmem %s0, %s594
        %p596 = scmp.lt.s32.totalorder %s32, 1
        %s597 = scalar_select %p596, %s32, 1
        %s598 = scalar_lea.vmem %s1, %s597
        %p599 = scmp.lt.s32.totalorder %s32, 1
        %s600 = scalar_select %p599, %s32, 1
        %s601 = scalar_lea.vmem %s2, %s600
        %p602 = scmp.lt.s32.totalorder %s32, 1
        %s603 = scalar_select %p602, %s32, 1
        %s604 = smul.addr %s603, 4
        %s605 = smul.addr %s604, 4
        %s606 = scalar_lea.vmem %s3, %s605
        %p607 = scmp.lt.s32.totalorder %s32, 1
        %s608 = scalar_select %p607, %s32, 1
        %s609 = scalar_lea.vmem %s4, %s608
        %p610 = scmp.lt.s32.totalorder %s32, 1
        %s611 = scalar_select %p610, %s32, 1
        %s612 = smul.addr %s611, 4
        %s613 = smul.addr %s612, 4
        %s614 = scalar_lea.vmem %s5, %s613
        %p615 = scmp.lt.s32.totalorder %s32, 1
        %s616 = scalar_select %p615, %s32, 1
        %s617 = scalar_lea.vmem %s6, %s616
        %p618 = scmp.lt.s32.totalorder %s32, 1
        %s619 = scalar_select %p618, %s32, 1
        %s620 = scalar_lea.vmem %s7, %s619
        %p621 = scmp.lt.s32.totalorder %s32, 1
        %s622 = scalar_select %p621, %s32, 1
        %s623 = scalar_lea.vmem %s8, %s622
        %p624 = scmp.lt.s32.totalorder %s32, 1
        %s625 = scalar_select %p624, %s32, 1
        %s626 = smul.addr %s625, 4
        %s627 = smul.addr %s626, 4
        %s628 = scalar_lea.vmem %s9, %s627
        %p629 = scmp.lt.s32.totalorder %s32, 1
        %s630 = scalar_select %p629, %s32, 1
        %s631 = scalar_lea.vmem %s10, %s630
        %p632 = scmp.lt.s32.totalorder %s32, 1
        %s633 = scalar_select %p632, %s32, 1
        %s634 = smul.addr %s633, 16
        %s635 = smul.addr %s634, 4
        %s636 = scalar_lea.vmem %s11, %s635
        %p637 = scmp.lt.s32.totalorder %s32, 1
        %s638 = scalar_select %p637, %s32, 1
        %s639 = scalar_lea.vmem %s12, %s638
        %p641 = scmp.eq.s32.totalorder %s32, 0
        // Predicated region
        $region73: #{tpu_custom_call.1} parent=71 // pred_check
          %p642 = pneg %p641
        $region74: #{tpu_custom_call.1} parent=71 // pred_check_branch
          %644 = sbr.rel (%p642) target = $region76
        $region75: #{tpu_custom_call.1} parent=71 // pred_region
          %v645 = vld [vmem:[%s595] sm:$0xff]
          %vm646 = vcmask 261120
          %647 = vst.msk [vmem:[#allocation2] sm:$0xff] %vm646, %v645
        $region76: #{tpu_custom_call.1} parent=71 // pred_fallthru
          _
        %v648 = vld [vmem:[#allocation2] sm:$0xff]
        %v649 = vld [vmem:[%s598] sm:$0x1]
        %v650 = vld [vmem:[%s601] sm:$0x1]
        %vm651 = vcmask 261120
        %v652 = vsel %vm651, %v648, 0.0
        %653 = vadd.xlane.f32.xlu0 %v652
        %v654 = vpop.xlane.xlu0 %653
        %v655 = vrcp.pop 32.0
        %v656 = vmul.f32 %v654, %v655
        %v657 = vsub.f32 %v648, %v656
        %v658 = vmul.f32 %v657, %v657
        %v659 = vsel %vm651, %v658, 0.0
        %660 = vadd.xlane.f32.xlu0 %v659
        %v661 = vpop.xlane.xlu0 %660
        %v662 = vmul.f32 %v661, %v655
        %v663 = vadd.f32 %v662, 1e-05
        %v664 = vrsqrt.pop %v663
        %v665 = vmul.f32 %v657, %v664
        %v667 = vlaneseq
        %v668 = vshrl.u32 %v667, 7
        %v669 = vsub.s32 0, %v668
        %v670 = vrot.slane %v649, %v669
        %v672 = vmul.f32 %v665, %v670
        %v674 = vlaneseq
        %v675 = vshrl.u32 %v674, 7
        %v676 = vsub.s32 0, %v675
        %v677 = vrot.slane %v650, %v676
        %v679 = vadd.f32 %v672, %v677
        %v680 = vpack.c.bf16 %v679, %v679
        %v681 = vld [vmem:[%s606] sm:$0xf]
        %v682 = vld [vmem:[%s606 + $0x4] sm:$0xf]
        %v683 = vld [vmem:[%s606 + $0x8] sm:$0xf]
        %v684 = vld [vmem:[%s606 + $0xc] sm:$0xf]
        %v685 = vld [vmem:[%s609] sm:$0x1]
        %v687 = vlaneseq
        %v688 = vshrl.u32 %v687, 7
        %v689 = vsub.s32 0, %v688
        %v690 = vrot.slane %v685, %v689
        %v696 = vunpack.c.l.b16 %v681
        %v697 = vunpack.c.l.b16 %v682
        %v698 = vunpack.c.l.b16 %v683
        %v699 = vunpack.c.l.b16 %v684
        %v700 = vpack.c.b16 %v697, %v696
        %v701 = vpack.c.b16 %v699, %v698
        %v705 = vsel %vm651, %v680, 0
        %707 = vmatprep.subr.bf16.mxu0 0
        %708 = vmatpush1.bf16.msra.mxu0 %v700
        %709 = vmatprep.subr.bf16.mxu0 0
        %710 = vmatpush1.bf16.msra.mxu0 %v701
        %711 = vmatprep.subr.bf16.mxu0 0
        %712 = vmatpush1.bf16.msra.mxu0 0
        %713 = vmatprep.subr.bf16.mxu0 0
        %714 = vmatpush1.bf16.msra.mxu0 0
        %715 = vmatprep.subr.bf16.mxu0 0
        %716 = vmatpush1.bf16.msra.mxu0 0
        %717 = vmatprep.subr.bf16.mxu0 0
        %718 = vmatpush1.bf16.msra.mxu0 0
        %719 = vmatprep.subr.bf16.mxu0 0
        %720 = vmatpush1.bf16.msra.mxu0 0
        %721 = vmatprep.subr.bf16.mxu0 0
        %722 = vmatpush1.bf16.msra.mxu0 0
        %723 = vmatprep.subr.bf16.mxu0 0
        %724 = vmatpush1.bf16.msra.mxu0 0
        %725 = vmatprep.subr.bf16.mxu0 0
        %726 = vmatpush1.bf16.msra.mxu0 0
        %727 = vmatprep.subr.bf16.mxu0 0
        %728 = vmatpush1.bf16.msra.mxu0 0
        %729 = vmatprep.subr.bf16.mxu0 0
        %730 = vmatpush1.bf16.msra.mxu0 0
        %731 = vmatprep.subr.bf16.mxu0 0
        %732 = vmatpush1.bf16.msra.mxu0 0
        %733 = vmatprep.subr.bf16.mxu0 0
        %734 = vmatpush1.bf16.msra.mxu0 0
        %735 = vmatprep.subr.bf16.mxu0 0
        %736 = vmatpush1.bf16.msra.mxu0 0
        %737 = vmatprep.subr.bf16.mxu0 0
        %738 = vmatpush1.bf16.msra.mxu0 0
        %739 = vmatprep.mubr.bf16.mxu0 0
        %740 = vmatmul.mubr.bf16.gmra.mrb[0].mxu0 %v705
        %v741 = vpop.f32.mrb[0].mxu0
        %v742 = vadd.f32 %v690, %v741
        %v743 = vpop.f32.mrb[0].mxu0
        %v744 = vpop.f32.mrb[0].mxu0
        %v745 = vpop.f32.mrb[0].mxu0
        %746 = vdwg.mxu0
        %v747 = vpack.c.bf16 %v742, %v742
        %749 = vrot.lane.b32.xlu0 %v747, 96
        %v750 = vpop.permute.xlu0 %749
        %vm751 = vcmask 64512
        %v753 = vsel %vm751, %v747, 0
        %v756 = vsel %vm751, %v750, 0
        %758 = vmatprep.subr.bf16.mxu0 0
        %759 = vmatpush1.bf16.xpose.msra.mxu0 %v756
        %760 = vmatprep.subr.bf16.mxu0 0
        %761 = vmatpush1.bf16.xpose.msra.mxu0 0
        %762 = vmatprep.subr.bf16.mxu0 0
        %763 = vmatpush1.bf16.xpose.msra.mxu0 0
        %764 = vmatprep.subr.bf16.mxu0 0
        %765 = vmatpush1.bf16.xpose.msra.mxu0 0
        %766 = vmatprep.subr.bf16.mxu0 0
        %767 = vmatpush1.bf16.xpose.msra.mxu0 0
        %768 = vmatprep.subr.bf16.mxu0 0
        %769 = vmatpush1.bf16.xpose.msra.mxu0 0
        %770 = vmatprep.subr.bf16.mxu0 0
        %771 = vmatpush1.bf16.xpose.msra.mxu0 0
        %772 = vmatprep.subr.bf16.mxu0 0
        %773 = vmatpush1.bf16.xpose.msra.mxu0 0
        %774 = vmatprep.subr.bf16.mxu0 0
        %775 = vmatpush1.bf16.xpose.msra.mxu0 0
        %776 = vmatprep.subr.bf16.mxu0 0
        %777 = vmatpush1.bf16.xpose.msra.mxu0 0
        %778 = vmatprep.subr.bf16.mxu0 0
        %779 = vmatpush1.bf16.xpose.msra.mxu0 0
        %780 = vmatprep.subr.bf16.mxu0 0
        %781 = vmatpush1.bf16.xpose.msra.mxu0 0
        %782 = vmatprep.subr.bf16.mxu0 0
        %783 = vmatpush1.bf16.xpose.msra.mxu0 0
        %784 = vmatprep.subr.bf16.mxu0 0
        %785 = vmatpush1.bf16.xpose.msra.mxu0 0
        %786 = vmatprep.subr.bf16.mxu0 0
        %787 = vmatpush1.bf16.xpose.msra.mxu0 0
        %788 = vmatprep.subr.bf16.mxu0 0
        %789 = vmatpush1.bf16.xpose.msra.mxu0 0
        %790 = vmatprep.mubr.bf16.mxu0 0
        %791 = vmatmul.mubr.bf16.gmra.mrb[0].mxu0 %v753
        %v792 = vpop.f32.mrb[0].mxu0
        %v793 = vadd.f32 0.0, %v792
        %v794 = vpop.f32.mrb[0].mxu0
        %v795 = vpop.f32.mrb[0].mxu0
        %v796 = vpop.f32.mrb[0].mxu0
        %797 = vdwg.mxu0
        %v798 = vsel %vm751, %v793, -inf
        %799 = vmax.xlane.f32.xlu0 %v798
        %v800 = vpop.xlane.xlu0 %799
        %v801 = vsub.f32 %v793, %v800
        %v802 = vmul.f32 %v801, 1.442695
        %v803 = vpow.pop %v802
        %v804 = vsel %vm751, %v803, 0.0
        %805 = vadd.xlane.f32.xlu0 %v804
        %v806 = vpop.xlane.xlu0 %805
        %v807 = vrcp.pop %v806
        %v808 = vmul.f32 %v803, %v807
        %v809 = vpack.c.bf16 %v808, %v808
        %810 = vrot.lane.b32.xlu0 %v747, 64
        %v811 = vpop.permute.xlu0 %810
        %v813 = vsel %vm751, %v809, 0
        %vm815 = vcmask 1043456
        %v817 = vsel %vm815, %v811, 0
        %819 = vmatprep.subr.bf16.mxu0 0
        %820 = vmatpush1.bf16.msra.mxu0 %v817
        %821 = vmatprep.subr.bf16.mxu0 0
        %822 = vmatpush1.bf16.msra.mxu0 0
        %823 = vmatprep.subr.bf16.mxu0 0
        %824 = vmatpush1.bf16.msra.mxu0 0
        %825 = vmatprep.subr.bf16.mxu0 0
        %826 = vmatpush1.bf16.msra.mxu0 0
        %827 = vmatprep.subr.bf16.mxu0 0
        %828 = vmatpush1.bf16.msra.mxu0 0
        %829 = vmatprep.subr.bf16.mxu0 0
        %830 = vmatpush1.bf16.msra.mxu0 0
        %831 = vmatprep.subr.bf16.mxu0 0
        %832 = vmatpush1.bf16.msra.mxu0 0
        %833 = vmatprep.subr.bf16.mxu0 0
        %834 = vmatpush1.bf16.msra.mxu0 0
        %835 = vmatprep.subr.bf16.mxu0 0
        %836 = vmatpush1.bf16.msra.mxu0 0
        %837 = vmatprep.subr.bf16.mxu0 0
        %838 = vmatpush1.bf16.msra.mxu0 0
        %839 = vmatprep.subr.bf16.mxu0 0
        %840 = vmatpush1.bf16.msra.mxu0 0
        %841 = vmatprep.subr.bf16.mxu0 0
        %842 = vmatpush1.bf16.msra.mxu0 0
        %843 = vmatprep.subr.bf16.mxu0 0
        %844 = vmatpush1.bf16.msra.mxu0 0
        %845 = vmatprep.subr.bf16.mxu0 0
        %846 = vmatpush1.bf16.msra.mxu0 0
        %847 = vmatprep.subr.bf16.mxu0 0
        %848 = vmatpush1.bf16.msra.mxu0 0
        %849 = vmatprep.subr.bf16.mxu0 0
        %850 = vmatpush1.bf16.msra.mxu0 0
        %851 = vmatprep.mubr.bf16.mxu0 0
        %852 = vmatmul.mubr.bf16.gmra.mrb[0].mxu0 %v813
        %v853 = vpop.f32.mrb[0].mxu0
        %v854 = vadd.f32 0.0, %v853
        %v855 = vpop.f32.mrb[0].mxu0
        %v856 = vpop.f32.mrb[0].mxu0
        %v857 = vpop.f32.mrb[0].mxu0
        %858 = vdwg.mxu0
        %v859 = vpack.c.bf16 %v854, %v854
        %vm860 = vcmask 60416
        %861 = vst.msk [vmem:[#allocation3] sm:$0xf] %vm860, %v859
        %862 = vrot.lane.b32.xlu0 %v747, 120
        %v863 = vpop.permute.xlu0 %862
        %864 = vrot.lane.b32.xlu0 %v747, 88
        %v865 = vpop.permute.xlu0 %864
        %v867 = vsel %vm751, %v863, 0
        %v870 = vsel %vm751, %v865, 0
        %872 = vmatprep.subr.bf16.mxu0 0
        %873 = vmatpush1.bf16.xpose.msra.mxu0 %v870
        %874 = vmatprep.subr.bf16.mxu0 0
        %875 = vmatpush1.bf16.xpose.msra.mxu0 0
        %876 = vmatprep.subr.bf16.mxu0 0
        %877 = vmatpush1.bf16.xpose.msra.mxu0 0
        %878 = vmatprep.subr.bf16.mxu0 0
        %879 = vmatpush1.bf16.xpose.msra.mxu0 0
        %880 = vmatprep.subr.bf16.mxu0 0
        %881 = vmatpush1.bf16.xpose.msra.mxu0 0
        %882 = vmatprep.subr.bf16.mxu0 0
        %883 = vmatpush1.bf16.xpose.msra.mxu0 0
        %884 = vmatprep.subr.bf16.mxu0 0
        %885 = vmatpush1.bf16.xpose.msra.mxu0 0
        %886 = vmatprep.subr.bf16.mxu0 0
        %887 = vmatpush1.bf16.xpose.msra.mxu0 0
        %888 = vmatprep.subr.bf16.mxu0 0
        %889 = vmatpush1.bf16.xpose.msra.mxu0 0
        %890 = vmatprep.subr.bf16.mxu0 0
        %891 = vmatpush1.bf16.xpose.msra.mxu0 0
        %892 = vmatprep.subr.bf16.mxu0 0
        %893 = vmatpush1.bf16.xpose.msra.mxu0 0
        %894 = vmatprep.subr.bf16.mxu0 0
        %895 = vmatpush1.bf16.xpose.msra.mxu0 0
        %896 = vmatprep.subr.bf16.mxu0 0
        %897 = vmatpush1.bf16.xpose.msra.mxu0 0
        %898 = vmatprep.subr.bf16.mxu0 0
        %899 = vmatpush1.bf16.xpose.msra.mxu0 0
        %900 = vmatprep.subr.bf16.mxu0 0
        %901 = vmatpush1.bf16.xpose.msra.mxu0 0
        %902 = vmatprep.subr.bf16.mxu0 0
        %903 = vmatpush1.bf16.xpose.msra.mxu0 0
        %904 = vmatprep.mubr.bf16.mxu0 0
        %905 = vmatmul.mubr.bf16.gmra.mrb[0].mxu0 %v867
        %v906 = vpop.f32.mrb[0].mxu0
        %v907 = vadd.f32 0.0, %v906
        %v908 = vpop.f32.mrb[0].mxu0
        %v909 = vpop.f32.mrb[0].mxu0
        %v910 = vpop.f32.mrb[0].mxu0
        %911 = vdwg.mxu0
        %v912 = vsel %vm751, %v907, -inf
        %913 = vmax.xlane.f32.xlu0 %v912
        %v914 = vpop.xlane.xlu0 %913
        %v915 = vsub.f32 %v907, %v914
        %v916 = vmul.f32 %v915, 1.442695
        %v917 = vpow.pop %v916
        %v918 = vsel %vm751, %v917, 0.0
        %919 = vadd.xlane.f32.xlu0 %v918
        %v920 = vpop.xlane.xlu0 %919
        %v921 = vrcp.pop %v920
        %v922 = vmul.f32 %v917, %v921
        %v923 = vpack.c.bf16 %v922, %v922
        %924 = vrot.lane.b32.xlu0 %v747, 56
        %v925 = vpop.permute.xlu0 %924
        %v927 = vsel %vm751, %v923, 0
        %v930 = vsel %vm815, %v925, 0
        %932 = vmatprep.subr.bf16.mxu0 0
        %933 = vmatpush1.bf16.msra.mxu0 %v930
        %934 = vmatprep.subr.bf16.mxu0 0
        %935 = vmatpush1.bf16.msra.mxu0 0
        %936 = vmatprep.subr.bf16.mxu0 0
        %937 = vmatpush1.bf16.msra.mxu0 0
        %938 = vmatprep.subr.bf16.mxu0 0
        %939 = vmatpush1.bf16.msra.mxu0 0
        %940 = vmatprep.subr.bf16.mxu0 0
        %941 = vmatpush1.bf16.msra.mxu0 0
        %942 = vmatprep.subr.bf16.mxu0 0
        %943 = vmatpush1.bf16.msra.mxu0 0
        %944 = vmatprep.subr.bf16.mxu0 0
        %945 = vmatpush1.bf16.msra.mxu0 0
        %946 = vmatprep.subr.bf16.mxu0 0
        %947 = vmatpush1.bf16.msra.mxu0 0
        %948 = vmatprep.subr.bf16.mxu0 0
        %949 = vmatpush1.bf16.msra.mxu0 0
        %950 = vmatprep.subr.bf16.mxu0 0
        %951 = vmatpush1.bf16.msra.mxu0 0
        %952 = vmatprep.subr.bf16.mxu0 0
        %953 = vmatpush1.bf16.msra.mxu0 0
        %954 = vmatprep.subr.bf16.mxu0 0
        %955 = vmatpush1.bf16.msra.mxu0 0
        %956 = vmatprep.subr.bf16.mxu0 0
        %957 = vmatpush1.bf16.msra.mxu0 0
        %958 = vmatprep.subr.bf16.mxu0 0
        %959 = vmatpush1.bf16.msra.mxu0 0
        %960 = vmatprep.subr.bf16.mxu0 0
        %961 = vmatpush1.bf16.msra.mxu0 0
        %962 = vmatprep.subr.bf16.mxu0 0
        %963 = vmatpush1.bf16.msra.mxu0 0
        %964 = vmatprep.mubr.bf16.mxu0 0
        %965 = vmatmul.mubr.bf16.gmra.mrb[0].mxu0 %v927
        %v966 = vpop.f32.mrb[0].mxu0
        %v967 = vadd.f32 0.0, %v966
        %v968 = vpop.f32.mrb[0].mxu0
        %v969 = vpop.f32.mrb[0].mxu0
        %v970 = vpop.f32.mrb[0].mxu0
        %971 = vdwg.mxu0
        %v972 = vpack.c.bf16 %v967, %v967
        %v974 = vunpack.c.l.b16 %v972
        %v975 = vpack.c.b16 %v974, %v974
        %976 = vrot.lane.b32.xlu0 %v975, 8
        %v977 = vpop.permute.xlu0 %976
        %vm979 = vcmask 126016
        %980 = vst.msk [vmem:[#allocation3] sm:$0xf] %vm979, %v977
        %981 = vrot.lane.b32.xlu0 %v747, 112
        %v982 = vpop.permute.xlu0 %981
        %983 = vrot.lane.b32.xlu0 %v747, 80
        %v984 = vpop.permute.xlu0 %983
        %v986 = vsel %vm751, %v982, 0
        %v989 = vsel %vm751, %v984, 0
        %991 = vmatprep.subr.bf16.mxu0 0
        %992 = vmatpush1.bf16.xpose.msra.mxu0 %v989
        %993 = vmatprep.subr.bf16.mxu0 0
        %994 = vmatpush1.bf16.xpose.msra.mxu0 0
        %995 = vmatprep.subr.bf16.mxu0 0
        %996 = vmatpush1.bf16.xpose.msra.mxu0 0
        %997 = vmatprep.subr.bf16.mxu0 0
        %998 = vmatpush1.bf16.xpose.msra.mxu0 0
        %999 = vmatprep.subr.bf16.mxu0 0
        %1000 = vmatpush1.bf16.xpose.msra.mxu0 0
        %1001 = vmatprep.subr.bf16.mxu0 0
        %1002 = vmatpush1.bf16.xpose.msra.mxu0 0
        %1003 = vmatprep.subr.bf16.mxu0 0
        %1004 = vmatpush1.bf16.xpose.msra.mxu0 0
        %1005 = vmatprep.subr.bf16.mxu0 0
        %1006 = vmatpush1.bf16.xpose.msra.mxu0 0
        %1007 = vmatprep.subr.bf16.mxu0 0
        %1008 = vmatpush1.bf16.xpose.msra.mxu0 0
        %1009 = vmatprep.subr.bf16.mxu0 0
        %1010 = vmatpush1.bf16.xpose.msra.mxu0 0
        %1011 = vmatprep.subr.bf16.mxu0 0
        %1012 = vmatpush1.bf16.xpose.msra.mxu0 0
        %1013 = vmatprep.subr.bf16.mxu0 0
        %1014 = vmatpush1.bf16.xpose.msra.mxu0 0
        %1015 = vmatprep.subr.bf16.mxu0 0
        %1016 = vmatpush1.bf16.xpose.msra.mxu0 0
        %1017 = vmatprep.subr.bf16.mxu0 0
        %1018 = vmatpush1.bf16.xpose.msra.mxu0 0
        %1019 = vmatprep.subr.bf16.mxu0 0
        %1020 = vmatpush1.bf16.xpose.msra.mxu0 0
        %1021 = vmatprep.subr.bf16.mxu0 0
        %1022 = vmatpush1.bf16.xpose.msra.mxu0 0
        %1023 = vmatprep.mubr.bf16.mxu0 0
        %1024 = vmatmul.mubr.bf16.gmra.mrb[0].mxu0 %v986
        %v1025 = vpop.f32.mrb[0].mxu0
        %v1026 = vadd.f32 0.0, %v1025
        %v1027 = vpop.f32.mrb[0].mxu0
        %v1028 = vpop.f32.mrb[0].mxu0
        %v1029 = vpop.f32.mrb[0].mxu0
        %1030 = vdwg.mxu0
        %v1031 = vsel %vm751, %v1026, -inf
        %1032 = vmax.xlane.f32.xlu0 %v1031
        %v1033 = vpop.xlane.xlu0 %1032
        %v1034 = vsub.f32 %v1026, %v1033
        %v1035 = vmul.f32 %v1034, 1.442695
        %v1036 = vpow.pop %v1035
        %v1037 = vsel %vm751, %v1036, 0.0
        %1038 = vadd.xlane.f32.xlu0 %v1037
        %v1039 = vpop.xlane.xlu0 %1038
        %v1040 = vrcp.pop %v1039
        %v1041 = vmul.f32 %v1036, %v1040
        %v1042 = vpack.c.bf16 %v1041, %v1041
        %1043 = vrot.lane.b32.xlu0 %v747, 48
        %v1044 = vpop.permute.xlu0 %1043
        %v1046 = vsel %vm751, %v1042, 0
        %v1049 = vsel %vm815, %v1044, 0
        %1051 = vmatprep.subr.bf16.mxu0 0
        %1052 = vmatpush1.bf16.msra.mxu0 %v1049
        %1053 = vmatprep.subr.bf16.mxu0 0
        %1054 = vmatpush1.bf16.msra.mxu0 0
        %1055 = vmatprep.subr.bf16.mxu0 0
        %1056 = vmatpush1.bf16.msra.mxu0 0
        %1057 = vmatprep.subr.bf16.mxu0 0
        %1058 = vmatpush1.bf16.msra.mxu0 0
        %1059 = vmatprep.subr.bf16.mxu0 0
        %1060 = vmatpush1.bf16.msra.mxu0 0
        %1061 = vmatprep.subr.bf16.mxu0 0
        %1062 = vmatpush1.bf16.msra.mxu0 0
        %1063 = vmatprep.subr.bf16.mxu0 0
        %1064 = vmatpush1.bf16.msra.mxu0 0
        %1065 = vmatprep.subr.bf16.mxu0 0
        %1066 = vmatpush1.bf16.msra.mxu0 0
        %1067 = vmatprep.subr.bf16.mxu0 0
        %1068 = vmatpush1.bf16.msra.mxu0 0
        %1069 = vmatprep.subr.bf16.mxu0 0
        %1070 = vmatpush1.bf16.msra.mxu0 0
        %1071 = vmatprep.subr.bf16.mxu0 0
        %1072 = vmatpush1.bf16.msra.mxu0 0
        %1073 = vmatprep.subr.bf16.mxu0 0
        %1074 = vmatpush1.bf16.msra.mxu0 0
        %1075 = vmatprep.subr.bf16.mxu0 0
        %1076 = vmatpush1.bf16.msra.mxu0 0
        %1077 = vmatprep.subr.bf16.mxu0 0
        %1078 = vmatpush1.bf16.msra.mxu0 0
        %1079 = vmatprep.subr.bf16.mxu0 0
        %1080 = vmatpush1.bf16.msra.mxu0 0
        %1081 = vmatprep.subr.bf16.mxu0 0
        %1082 = vmatpush1.bf16.msra.mxu0 0
        %1083 = vmatprep.mubr.bf16.mxu0 0
        %1084 = vmatmul.mubr.bf16.gmra.mrb[0].mxu0 %v1046
        %v1085 = vpop.f32.mrb[0].mxu0
        %v1086 = vadd.f32 0.0, %v1085
        %v1087 = vpop.f32.mrb[0].mxu0
        %v1088 = vpop.f32.mrb[0].mxu0
        %v1089 = vpop.f32.mrb[0].mxu0
        %1090 = vdwg.mxu0
        %v1091 = vpack.c.bf16 %v1086, %v1086
        %v1093 = vunpack.c.l.b16 %v1091
        %v1094 = vpack.c.b16 %v1093, %v1093
        %1095 = vrot.lane.b32.xlu0 %v1094, 16
        %v1096 = vpop.permute.xlu0 %1095
        %vm1098 = vcmask 191616
        %1099 = vst.msk [vmem:[#allocation3] sm:$0xf] %vm1098, %v1096
        %1100 = vrot.lane.b32.xlu0 %v747, 104
        %v1101 = vpop.permute.xlu0 %1100
        %1102 = vrot.lane.b32.xlu0 %v747, 72
        %v1103 = vpop.permute.xlu0 %1102
        %v1105 = vsel %vm751, %v1101, 0
        %v1108 = vsel %vm751, %v1103, 0
        %1110 = vmatprep.subr.bf16.mxu0 0
        %1111 = vmatpush1.bf16.xpose.msra.mxu0 %v1108
        %1112 = vmatprep.subr.bf16.mxu0 0
        %1113 = vmatpush1.bf16.xpose.msra.mxu0 0
        %1114 = vmatprep.subr.bf16.mxu0 0
        %1115 = vmatpush1.bf16.xpose.msra.mxu0 0
        %1116 = vmatprep.subr.bf16.mxu0 0
        %1117 = vmatpush1.bf16.xpose.msra.mxu0 0
        %1118 = vmatprep.subr.bf16.mxu0 0
        %1119 = vmatpush1.bf16.xpose.msra.mxu0 0
        %1120 = vmatprep.subr.bf16.mxu0 0
        %1121 = vmatpush1.bf16.xpose.msra.mxu0 0
        %1122 = vmatprep.subr.bf16.mxu0 0
        %1123 = vmatpush1.bf16.xpose.msra.mxu0 0
        %1124 = vmatprep.subr.bf16.mxu0 0
        %1125 = vmatpush1.bf16.xpose.msra.mxu0 0
        %1126 = vmatprep.subr.bf16.mxu0 0
        %1127 = vmatpush1.bf16.xpose.msra.mxu0 0
        %1128 = vmatprep.subr.bf16.mxu0 0
        %1129 = vmatpush1.bf16.xpose.msra.mxu0 0
        %1130 = vmatprep.subr.bf16.mxu0 0
        %1131 = vmatpush1.bf16.xpose.msra.mxu0 0
        %1132 = vmatprep.subr.bf16.mxu0 0
        %1133 = vmatpush1.bf16.xpose.msra.mxu0 0
        %1134 = vmatprep.subr.bf16.mxu0 0
        %1135 = vmatpush1.bf16.xpose.msra.mxu0 0
        %1136 = vmatprep.subr.bf16.mxu0 0
        %1137 = vmatpush1.bf16.xpose.msra.mxu0 0
        %1138 = vmatprep.subr.bf16.mxu0 0
        %1139 = vmatpush1.bf16.xpose.msra.mxu0 0
        %1140 = vmatprep.subr.bf16.mxu0 0
        %1141 = vmatpush1.bf16.xpose.msra.mxu0 0
        %1142 = vmatprep.mubr.bf16.mxu0 0
        %1143 = vmatmul.mubr.bf16.gmra.mrb[0].mxu0 %v1105
        %v1144 = vpop.f32.mrb[0].mxu0
        %v1145 = vadd.f32 0.0, %v1144
        %v1146 = vpop.f32.mrb[0].mxu0
        %v1147 = vpop.f32.mrb[0].mxu0
        %v1148 = vpop.f32.mrb[0].mxu0
        %1149 = vdwg.mxu0
        %v1150 = vsel %vm751, %v1145, -inf
        %1151 = vmax.xlane.f32.xlu0 %v1150
        %v1152 = vpop.xlane.xlu0 %1151
        %v1153 = vsub.f32 %v1145, %v1152
        %v1154 = vmul.f32 %v1153, 1.442695
        %v1155 = vpow.pop %v1154
        %v1156 = vsel %vm751, %v1155, 0.0
        %1157 = vadd.xlane.f32.xlu0 %v1156
        %v1158 = vpop.xlane.xlu0 %1157
        %v1159 = vrcp.pop %v1158
        %v1160 = vmul.f32 %v1155, %v1159
        %v1161 = vpack.c.bf16 %v1160, %v1160
        %1162 = vrot.lane.b32.xlu0 %v747, 40
        %v1163 = vpop.permute.xlu0 %1162
        %v1165 = vsel %vm751, %v1161, 0
        %v1168 = vsel %vm815, %v1163, 0
        %1170 = vmatprep.subr.bf16.mxu0 0
        %1171 = vmatpush1.bf16.msra.mxu0 %v1168
        %1172 = vmatprep.subr.bf16.mxu0 0
        %1173 = vmatpush1.bf16.msra.mxu0 0
        %1174 = vmatprep.subr.bf16.mxu0 0
        %1175 = vmatpush1.bf16.msra.mxu0 0
        %1176 = vmatprep.subr.bf16.mxu0 0
        %1177 = vmatpush1.bf16.msra.mxu0 0
        %1178 = vmatprep.subr.bf16.mxu0 0
        %1179 = vmatpush1.bf16.msra.mxu0 0
        %1180 = vmatprep.subr.bf16.mxu0 0
        %1181 = vmatpush1.bf16.msra.mxu0 0
        %1182 = vmatprep.subr.bf16.mxu0 0
        %1183 = vmatpush1.bf16.msra.mxu0 0
        %1184 = vmatprep.subr.bf16.mxu0 0
        %1185 = vmatpush1.bf16.msra.mxu0 0
        %1186 = vmatprep.subr.bf16.mxu0 0
        %1187 = vmatpush1.bf16.msra.mxu0 0
        %1188 = vmatprep.subr.bf16.mxu0 0
        %1189 = vmatpush1.bf16.msra.mxu0 0
        %1190 = vmatprep.subr.bf16.mxu0 0
        %1191 = vmatpush1.bf16.msra.mxu0 0
        %1192 = vmatprep.subr.bf16.mxu0 0
        %1193 = vmatpush1.bf16.msra.mxu0 0
        %1194 = vmatprep.subr.bf16.mxu0 0
        %1195 = vmatpush1.bf16.msra.mxu0 0
        %1196 = vmatprep.subr.bf16.mxu0 0
        %1197 = vmatpush1.bf16.msra.mxu0 0
        %1198 = vmatprep.subr.bf16.mxu0 0
        %1199 = vmatpush1.bf16.msra.mxu0 0
        %1200 = vmatprep.subr.bf16.mxu0 0
        %1201 = vmatpush1.bf16.msra.mxu0 0
        %1202 = vmatprep.mubr.bf16.mxu0 0
        %1203 = vmatmul.mubr.bf16.gmra.mrb[0].mxu0 %v1165
        %v1204 = vpop.f32.mrb[0].mxu0
        %v1205 = vadd.f32 0.0, %v1204
        %v1206 = vpop.f32.mrb[0].mxu0
        %v1207 = vpop.f32.mrb[0].mxu0
        %v1208 = vpop.f32.mrb[0].mxu0
        %1209 = vdwg.mxu0
        %v1210 = vpack.c.bf16 %v1205, %v1205
        %v1212 = vunpack.c.l.b16 %v1210
        %v1213 = vpack.c.b16 %v1212, %v1212
        %1214 = vrot.lane.b32.xlu0 %v1213, 24
        %v1215 = vpop.permute.xlu0 %1214
        %vm1217 = vcmask 257216
        %1218 = vst.msk [vmem:[#allocation3] sm:$0xf] %vm1217, %v1215
        %v1219 = vld [vmem:[#allocation3] sm:$0xf]
        %v1220 = vld [vmem:[%s614] sm:$0xf]
        %v1221 = vld [vmem:[%s614 + $0x4] sm:$0xf]
        %v1222 = vld [vmem:[%s614 + $0x8] sm:$0xf]
        %v1223 = vld [vmem:[%s614 + $0xc] sm:$0xf]
        %v1228 = vunpack.c.l.b16 %v1220
        %v1229 = vunpack.c.l.b16 %v1221
        %v1230 = vunpack.c.l.b16 %v1222
        %v1231 = vunpack.c.l.b16 %v1223
        %v1232 = vpack.c.b16 %v1229, %v1228
        %v1233 = vpack.c.b16 %v1231, %v1230
        %v1237 = vsel %vm651, %v1219, 0
        %1239 = vmatprep.subr.bf16.mxu0 0
        %1240 = vmatpush1.bf16.msra.mxu0 %v1232
        %1241 = vmatprep.subr.bf16.mxu0 0
        %1242 = vmatpush1.bf16.msra.mxu0 %v1233
        %1243 = vmatprep.subr.bf16.mxu0 0
        %1244 = vmatpush1.bf16.msra.mxu0 0
        %1245 = vmatprep.subr.bf16.mxu0 0
        %1246 = vmatpush1.bf16.msra.mxu0 0
        %1247 = vmatprep.subr.bf16.mxu0 0
        %1248 = vmatpush1.bf16.msra.mxu0 0
        %1249 = vmatprep.subr.bf16.mxu0 0
        %1250 = vmatpush1.bf16.msra.mxu0 0
        %1251 = vmatprep.subr.bf16.mxu0 0
        %1252 = vmatpush1.bf16.msra.mxu0 0
        %1253 = vmatprep.subr.bf16.mxu0 0
        %1254 = vmatpush1.bf16.msra.mxu0 0
        %1255 = vmatprep.subr.bf16.mxu0 0
        %1256 = vmatpush1.bf16.msra.mxu0 0
        %1257 = vmatprep.subr.bf16.mxu0 0
        %1258 = vmatpush1.bf16.msra.mxu0 0
        %1259 = vmatprep.subr.bf16.mxu0 0
        %1260 = vmatpush1.bf16.msra.mxu0 0
        %1261 = vmatprep.subr.bf16.mxu0 0
        %1262 = vmatpush1.bf16.msra.mxu0 0
        %1263 = vmatprep.subr.bf16.mxu0 0
        %1264 = vmatpush1.bf16.msra.mxu0 0
        %1265 = vmatprep.subr.bf16.mxu0 0
        %1266 = vmatpush1.bf16.msra.mxu0 0
        %1267 = vmatprep.subr.bf16.mxu0 0
        %1268 = vmatpush1.bf16.msra.mxu0 0
        %1269 = vmatprep.subr.bf16.mxu0 0
        %1270 = vmatpush1.bf16.msra.mxu0 0
        %1271 = vmatprep.mubr.bf16.mxu0 0
        %1272 = vmatmul.mubr.bf16.gmra.mrb[0].mxu0 %v1237
        %v1273 = vpop.f32.mrb[0].mxu0
        %v1274 = vadd.f32 0.0, %v1273
        %v1275 = vpop.f32.mrb[0].mxu0
        %v1276 = vpop.f32.mrb[0].mxu0
        %v1277 = vpop.f32.mrb[0].mxu0
        %1278 = vdwg.mxu0
        %v1279 = vadd.f32 %v648, %v1274
        %v1280 = vld [vmem:[%s617] sm:$0x1]
        %v1282 = vlaneseq
        %v1283 = vshrl.u32 %v1282, 7
        %v1284 = vsub.s32 0, %v1283
        %v1285 = vrot.slane %v1280, %v1284
        %v1287 = vadd.f32 %v1279, %v1285
        %v1288 = vld [vmem:[%s620] sm:$0x1]
        %v1289 = vld [vmem:[%s623] sm:$0x1]
        %v1290 = vsel %vm651, %v1287, 0.0
        %1291 = vadd.xlane.f32.xlu0 %v1290
        %v1292 = vpop.xlane.xlu0 %1291
        %v1293 = vmul.f32 %v1292, %v655
        %v1294 = vsub.f32 %v1287, %v1293
        %v1295 = vmul.f32 %v1294, %v1294
        %v1296 = vsel %vm651, %v1295, 0.0
        %1297 = vadd.xlane.f32.xlu0 %v1296
        %v1298 = vpop.xlane.xlu0 %1297
        %v1299 = vmul.f32 %v1298, %v655
        %v1300 = vadd.f32 %v1299, 1e-05
        %v1301 = vrsqrt.pop %v1300
        %v1302 = vmul.f32 %v1294, %v1301
        %v1304 = vlaneseq
        %v1305 = vshrl.u32 %v1304, 7
        %v1306 = vsub.s32 0, %v1305
        %v1307 = vrot.slane %v1288, %v1306
        %v1309 = vmul.f32 %v1302, %v1307
        %v1311 = vlaneseq
        %v1312 = vshrl.u32 %v1311, 7
        %v1313 = vsub.s32 0, %v1312
        %v1314 = vrot.slane %v1289, %v1313
        %v1316 = vadd.f32 %v1309, %v1314
        %v1317 = vpack.c.bf16 %v1316, %v1316
        %v1318 = vld [vmem:[%s628] sm:$0xf]
        %v1319 = vld [vmem:[%s628 + $0x4] sm:$0xf]
        %v1320 = vld [vmem:[%s628 + $0x8] sm:$0xf]
        %v1321 = vld [vmem:[%s628 + $0xc] sm:$0xf]
        %v1322 = vld [vmem:[%s631] sm:$0x1]
        %v1323 = vld [vmem:[%s636] sm:$0xf]
        %v1324 = vld [vmem:[%s636 + $0x4] sm:$0xf]
        %v1325 = vld [vmem:[%s636 + $0x8] sm:$0xf]
        %v1326 = vld [vmem:[%s636 + $0xc] sm:$0xf]
        %v1327 = vld [vmem:[%s636 + $0x10] sm:$0xf]
        %v1328 = vld [vmem:[%s636 + $0x14] sm:$0xf]
        %v1329 = vld [vmem:[%s636 + $0x18] sm:$0xf]
        %v1330 = vld [vmem:[%s636 + $0x1c] sm:$0xf]
        %v1331 = vld [vmem:[%s636 + $0x20] sm:$0xf]
        %v1332 = vld [vmem:[%s636 + $0x24] sm:$0xf]
        %v1333 = vld [vmem:[%s636 + $0x28] sm:$0xf]
        %v1334 = vld [vmem:[%s636 + $0x2c] sm:$0xf]
        %v1335 = vld [vmem:[%s636 + $0x30] sm:$0xf]
        %v1336 = vld [vmem:[%s636 + $0x34] sm:$0xf]
        %v1337 = vld [vmem:[%s636 + $0x38] sm:$0xf]
        %v1338 = vld [vmem:[%s636 + $0x3c] sm:$0xf]
        %v1340 = vlaneseq
        %v1341 = vshrl.u32 %v1340, 7
        %v1342 = vsub.s32 0, %v1341
        %v1343 = vrot.slane %v1322, %v1342
        %v1349 = vunpack.c.l.b16 %v1318
        %v1350 = vunpack.c.l.b16 %v1319
        %v1351 = vunpack.c.l.b16 %v1320
        %v1352 = vunpack.c.l.b16 %v1321
        %v1353 = vpack.c.b16 %v1350, %v1349
        %v1354 = vpack.c.b16 %v1352, %v1351
        %v1358 = vsel %vm651, %v1317, 0
        %1360 = vmatprep.subr.bf16.mxu0 0
        %1361 = vmatpush1.bf16.msra.mxu0 %v1353
        %1362 = vmatprep.subr.bf16.mxu0 0
        %1363 = vmatpush1.bf16.msra.mxu0 %v1354
        %1364 = vmatprep.subr.bf16.mxu0 0
        %1365 = vmatpush1.bf16.msra.mxu0 0
        %1366 = vmatprep.subr.bf16.mxu0 0
        %1367 = vmatpush1.bf16.msra.mxu0 0
        %1368 = vmatprep.subr.bf16.mxu0 0
        %1369 = vmatpush1.bf16.msra.mxu0 0
        %1370 = vmatprep.subr.bf16.mxu0 0
        %1371 = vmatpush1.bf16.msra.mxu0 0
        %1372 = vmatprep.subr.bf16.mxu0 0
        %1373 = vmatpush1.bf16.msra.mxu0 0
        %1374 = vmatprep.subr.bf16.mxu0 0
        %1375 = vmatpush1.bf16.msra.mxu0 0
        %1376 = vmatprep.subr.bf16.mxu0 0
        %1377 = vmatpush1.bf16.msra.mxu0 0
        %1378 = vmatprep.subr.bf16.mxu0 0
        %1379 = vmatpush1.bf16.msra.mxu0 0
        %1380 = vmatprep.subr.bf16.mxu0 0
        %1381 = vmatpush1.bf16.msra.mxu0 0
        %1382 = vmatprep.subr.bf16.mxu0 0
        %1383 = vmatpush1.bf16.msra.mxu0 0
        %1384 = vmatprep.subr.bf16.mxu0 0
        %1385 = vmatpush1.bf16.msra.mxu0 0
        %1386 = vmatprep.subr.bf16.mxu0 0
        %1387 = vmatpush1.bf16.msra.mxu0 0
        %1388 = vmatprep.subr.bf16.mxu0 0
        %1389 = vmatpush1.bf16.msra.mxu0 0
        %1390 = vmatprep.subr.bf16.mxu0 0
        %1391 = vmatpush1.bf16.msra.mxu0 0
        %1392 = vmatprep.mubr.bf16.mxu0 0
        %1393 = vmatmul.mubr.bf16.gmra.mrb[0].mxu0 %v1358
        %v1394 = vpop.f32.mrb[0].mxu0
        %v1395 = vadd.f32 %v1343, %v1394
        %v1396 = vpop.f32.mrb[0].mxu0
        %v1397 = vpop.f32.mrb[0].mxu0
        %v1398 = vpop.f32.mrb[0].mxu0
        %1399 = vdwg.mxu0
        %v1400 = vmul.f32 %v1395, 0.5
        %v1401 = vmul.f32 %v1395, 0.044715
        %v1402 = vmul.f32 %v1401, %v1395
        %v1403 = vmul.f32 %v1402, %v1395
        %v1404 = vadd.f32 %v1395, %v1403
        %v1405 = vmul.f32 %v1404, 0.7978846
        %v1406 = vtanh.pop %v1405
        %v1407 = vadd.f32 %v1406, 1.0
        %v1408 = vmul.f32 %v1400, %v1407
        %v1409 = vpack.c.bf16 %v1408, %v1408
        %v1426 = vunpack.c.l.b16 %v1323
        %v1427 = vunpack.c.l.b16 %v1324
        %v1428 = vunpack.c.l.b16 %v1325
        %v1429 = vunpack.c.l.b16 %v1326
        %v1430 = vunpack.c.l.b16 %v1327
        %v1431 = vunpack.c.l.b16 %v1328
        %v1432 = vunpack.c.l.b16 %v1329
        %v1433 = vunpack.c.l.b16 %v1330
        %v1434 = vunpack.c.l.b16 %v1331
        %v1435 = vunpack.c.l.b16 %v1332
        %v1436 = vunpack.c.l.b16 %v1333
        %v1437 = vunpack.c.l.b16 %v1334
        %v1438 = vunpack.c.l.b16 %v1335
        %v1439 = vunpack.c.l.b16 %v1336
        %v1440 = vunpack.c.l.b16 %v1337
        %v1441 = vunpack.c.l.b16 %v1338
        %v1442 = vpack.c.b16 %v1427, %v1426
        %v1443 = vpack.c.b16 %v1429, %v1428
        %v1444 = vpack.c.b16 %v1431, %v1430
        %v1445 = vpack.c.b16 %v1433, %v1432
        %v1446 = vpack.c.b16 %v1435, %v1434
        %v1447 = vpack.c.b16 %v1437, %v1436
        %v1448 = vpack.c.b16 %v1439, %v1438
        %v1449 = vpack.c.b16 %v1441, %v1440
        %1458 = vmatprep.subr.bf16.mxu0 0
        %1459 = vmatpush1.bf16.msra.mxu0 %v1442
        %1460 = vmatprep.subr.bf16.mxu0 0
        %1461 = vmatpush1.bf16.msra.mxu0 %v1443
        %1462 = vmatprep.subr.bf16.mxu0 0
        %1463 = vmatpush1.bf16.msra.mxu0 %v1444
        %1464 = vmatprep.subr.bf16.mxu0 0
        %1465 = vmatpush1.bf16.msra.mxu0 %v1445
        %1466 = vmatprep.subr.bf16.mxu0 0
        %1467 = vmatpush1.bf16.msra.mxu0 %v1446
        %1468 = vmatprep.subr.bf16.mxu0 0
        %1469 = vmatpush1.bf16.msra.mxu0 %v1447
        %1470 = vmatprep.subr.bf16.mxu0 0
        %1471 = vmatpush1.bf16.msra.mxu0 %v1448
        %1472 = vmatprep.subr.bf16.mxu0 0
        %1473 = vmatpush1.bf16.msra.mxu0 %v1449
        %1474 = vmatprep.subr.bf16.mxu0 0
        %1475 = vmatpush1.bf16.msra.mxu0 0
        %1476 = vmatprep.subr.bf16.mxu0 0
        %1477 = vmatpush1.bf16.msra.mxu0 0
        %1478 = vmatprep.subr.bf16.mxu0 0
        %1479 = vmatpush1.bf16.msra.mxu0 0
        %1480 = vmatprep.subr.bf16.mxu0 0
        %1481 = vmatpush1.bf16.msra.mxu0 0
        %1482 = vmatprep.subr.bf16.mxu0 0
        %1483 = vmatpush1.bf16.msra.mxu0 0
        %1484 = vmatprep.subr.bf16.mxu0 0
        %1485 = vmatpush1.bf16.msra.mxu0 0
        %1486 = vmatprep.subr.bf16.mxu0 0
        %1487 = vmatpush1.bf16.msra.mxu0 0
        %1488 = vmatprep.subr.bf16.mxu0 0
        %1489 = vmatpush1.bf16.msra.mxu0 0
        %1490 = vmatprep.mubr.bf16.mxu0 0
        %1491 = vmatmul.mubr.bf16.gmra.mrb[0].mxu0 %v1409
        %v1492 = vpop.f32.mrb[0].mxu0
        %v1493 = vadd.f32 0.0, %v1492
        %v1494 = vpop.f32.mrb[0].mxu0
        %v1495 = vpop.f32.mrb[0].mxu0
        %v1496 = vpop.f32.mrb[0].mxu0
        %1497 = vdwg.mxu0
        %v1498 = vadd.f32 %v1287, %v1493
        %v1499 = vld [vmem:[%s639] sm:$0x1]
        %v1501 = vlaneseq
        %v1502 = vshrl.u32 %v1501, 7
        %v1503 = vsub.s32 0, %v1502
        %v1504 = vrot.slane %v1499, %v1503
        %v1506 = vadd.f32 %v1498, %v1504
        %1507 = vst.msk [vmem:[#allocation2] sm:$0xff] %vm651, %v1506
        %p1508 = scmp.eq.s32.totalorder %s32, 1
        // Predicated region
        $region77: #{tpu_custom_call.1} parent=71 // pred_check
          %p1509 = pneg %p1508
        $region78: #{tpu_custom_call.1} parent=71 // pred_check_branch
          %1511 = sbr.rel (%p1509) target = $region80
        $region79: #{tpu_custom_call.1} parent=71 // pred_region
          %v1512 = vld [vmem:[#allocation2] sm:$0xff]
          %1513 = vst.msk [vmem:[%s591] sm:$0xff] %vm651, %v1512
        $region80: #{tpu_custom_call.1} parent=71 // pred_fallthru
          _
        %s1514 = sand.u32 %s385, 1
        %s1515 = scalar_lea.sflag [#allocation5], %s1514
        %s1516 = sand.u32 %s385, 1
        %s1517 = smul.addr %s1516, 8
        %s1518 = scalar_lea.vmem [#allocation4], %s1517
        // Predicated region
        $region81: #{tpu_custom_call.1} parent=71 // pred_check
          %p1519 = pneg %p395
        $region82: #{tpu_custom_call.1} parent=71 // pred_check_branch
          %1521 = sbr.rel (%p1519) target = $region84
        $region83: #{tpu_custom_call.1} parent=71 // pred_region
          %s1523 = ssub.s32 128, 128
          %1524 = vsyncadd %s1515, %s1523
          %s1525 = smul.addr %s31, 128
          %s1526 = scalar_lea.hbm %s13, %s1525
          %s1528 = sshll.u32 %s1518, 4
          %s1529 = int_to_ptr.vmem [resolvable:$true] %s1528
          %1531 = dma.vmem_to_hbm [thread:$0]  %s1529, 128, %s1526, %s1515
        $region84: #{tpu_custom_call.1} parent=71 // pred_fallthru
          _
      $region72: #{tpu_custom_call.1} parent=5 // pred_fallthru
        _
      %p1532 = scmp.le.s32.totalorder 2, %s22
      // Predicated region
      $region85: #{tpu_custom_call.1} parent=5 // pred_check
        %p1533 = pneg %p1532
      $region86: #{tpu_custom_call.1} parent=5 // pred_check_branch
        %1535 = sbr.rel (%p1533) target = $region88
      $region87: #{tpu_custom_call.1} parent=5 // pred_region
        %s1536 = ssub.s32 %s22, 2
        // Predicated region
        $region89: #{tpu_custom_call.1} parent=87 // pred_check
          %p1537 = pneg %p401
        $region90: #{tpu_custom_call.1} parent=87 // pred_check_branch
          %1539 = sbr.rel (%p1537) target = $region92
        $region91: #{tpu_custom_call.1} parent=87 // pred_region
          %s1540 = sand.u32 %s386, 1
          %s1541 = scalar_lea.sflag [#allocation5], %s1540
          %s1542 = sand.u32 %s386, 1
          %s1543 = smul.addr %s1542, 8
          %s1544 = scalar_lea.vmem [#allocation4], %s1543
          %1545 = dma.done %s1541, 128
        $region92: #{tpu_custom_call.1} parent=87 // pred_fallthru
          _
      $region88: #{tpu_custom_call.1} parent=5 // pred_fallthru
        _
    $region6: #{tpu_custom_call.1} parent=1 // loop_footer
      %s26 = sadd.s32 1, %s22
    $region7: #{tpu_custom_call.1} parent=1 // loop_footer_branch
      %21 = sbr.rel target = $region3
    $region8: #{tpu_custom_call.1} parent=1 // loop_exit
      _
    %1546 = vsyncpa [#allocation5], 1
    %s1547 = scalar_lea.sflag [#allocation5], 1
    %1548 = vsyncpa %s1547, 1

</llo_original>
